<compile_context>
chip_gen: v7x
topology: tpu7x:2x2x1
jax: 0.10.0
libtpu: 0.0.40
codegen_flags: <defaults>
</compile_context>

<pallas_src>
import functools

import numpy as np
import jax
import jax.numpy as jnp
from jax import lax
from jax.experimental import pallas as pl
from jax.experimental.pallas import tpu as pltpu

BN_EPS = 1e-5


# ----------------------------------------------------------------------------
# Pallas kernel: full ResBottleneck on a VMEM/vreg-resident activation
# ----------------------------------------------------------------------------
def _resbottleneck_kernel(x_ref, wband_ref, scale_ref, shift_ref, bias_ref,
                          o_ref, *, block_nums):
    # x_ref:     (Bb, H, WC) f32     activation, channels-last row-fused,
    #                                WC = W * C_PAD = 128 (lane-dense)
    # wband_ref: (n_conv, 3, WC, WC) bf16  per-kh banded im2col conv weights
    # scale_ref: (n_conv, 1, WC) f32 folded BN scale  gamma/sqrt(var+eps)
    # shift_ref: (n_conv, 1, WC) f32 folded BN shift  beta - mean*scale
    # bias_ref:  (n_conv, 1, WC) f32 conv bias tiled over W
    # o_ref:     (Bb, H, WC) f32
    Bb, H, WC = x_ref.shape

    h = x_ref[...]                                      # stays in VMEM/vregs
    zrow = jnp.zeros((Bb, 1, WC), jnp.bfloat16)         # hoisted border row

    # block_nums is small and static -> Python unroll.  For large block_nums
    # this would become an "arbitrary" grid axis with per-block weight
    # BlockSpecs and the activation persisting in a VMEM scratch.
    for blk in range(block_nums):
        res = h
        for j in range(2):                              # conv1, conv2
            k = 2 * blk + j
            # BatchNorm(eval) + ReLU, f32, full-lane.
            y = jnp.maximum(h * scale_ref[k] + shift_ref[k], 0.0)
            yb = y.astype(jnp.bfloat16)
            # kh row-shifts kept in registers; the zero row is the H padding.
            y_up = jnp.concatenate([zrow, yb[:, :H - 1, :]], axis=1)  # y[h-1]
            y_dn = jnp.concatenate([yb[:, 1:, :], zrow], axis=1)      # y[h+1]
            # One accumulated MXU matmul per kh tap; the kw taps and the W
            # zero-padding are folded into each (WC, WC) banded weight slice.
            acc = jnp.dot(y_up.reshape(Bb * H, WC), wband_ref[k, 0],
                          preferred_element_type=jnp.float32)
            acc = acc + jnp.dot(yb.reshape(Bb * H, WC), wband_ref[k, 1],
                                preferred_element_type=jnp.float32)
            acc = acc + jnp.dot(y_dn.reshape(Bb * H, WC), wband_ref[k, 2],
                                preferred_element_type=jnp.float32)
            h = (acc + bias_ref[k]).reshape(Bb, H, WC)
        h = h + res                                     # identity shortcut
    o_ref[...] = h


def resbottleneck_forward(x_nchw, wband, bn_scale, bn_shift, bias, *,
                          block_nums, c_pad):
    """x_nchw: (B, C, H, W) f32.  Prepared params from prepare_params()."""
    B, C, H, W = x_nchw.shape
    Cp = c_pad
    WC = W * Cp
    n_conv = 2 * block_nums

    # NCHW -> zero-padded channels-last row-fused (B, H, W*Cp).  Under jit the
    # transpose+pad+reshape fuse into a single copy; a channels-last model
    # would keep this layout end-to-end and skip it entirely.
    xf = jnp.transpose(x_nchw, (0, 2, 3, 1))            # (B, H, W, C)
    xf = jnp.pad(xf, ((0, 0), (0, 0), (0, 0), (0, Cp - C)))
    xf = xf.reshape(B, H, WC)

    kernel = functools.partial(_resbottleneck_kernel, block_nums=block_nums)
    yf = pl.pallas_call(
        kernel,
        out_shape=jax.ShapeDtypeStruct((B, H, WC), jnp.float32),
        grid_spec=pltpu.PrefetchScalarGridSpec(
            num_scalar_prefetch=0,
            grid=(B,),                                   # parallel over batch
            in_specs=[
                pl.BlockSpec((1, H, WC), lambda b: (b, 0, 0)),
                pl.BlockSpec((n_conv, 3, WC, WC), lambda b: (0, 0, 0, 0)),
                pl.BlockSpec((n_conv, 1, WC), lambda b: (0, 0, 0)),
                pl.BlockSpec((n_conv, 1, WC), lambda b: (0, 0, 0)),
                pl.BlockSpec((n_conv, 1, WC), lambda b: (0, 0, 0)),
            ],
            out_specs=pl.BlockSpec((1, H, WC), lambda b: (b, 0, 0)),
        ),
        compiler_params=pltpu.CompilerParams(
            dimension_semantics=("parallel",),           # v7x: 2 TensorCores
            vmem_limit_bytes=32 * 1024 * 1024,
        ),
    )(xf, wband, bn_scale, bn_shift, bias)

    # Drop the pad channels, back to NCHW (PyTorch interface).
    y = yf.reshape(B, H, W, Cp)[..., :C]
    return jnp.transpose(y, (0, 3, 1, 2))


# ----------------------------------------------------------------------------
# One-time parameter preparation (outside jit)
# ----------------------------------------------------------------------------
def _band_selector(W):
    # S[dw, wi, w] = 1 iff wi == w + dw - 1  (W zero-padding is implicit:
    # out-of-range taps simply have no matching row).
    S = np.zeros((3, W, W), np.float32)
    for dw in range(3):
        for w in range(W):
            wi = w + dw - 1
            if 0 <= wi < W:
                S[dw, wi, w] = 1.0
    return jnp.asarray(S)


def prepare_params(raw_params, W, c_pad):
    """Fold BN into scale/shift, zero-pad channels to c_pad, tile per-channel
    vectors over W, and build per-kh banded weights (3, W*Cp, W*Cp) per conv.
    Done once, outside the jitted forward, so kernel inputs arrive in
    MXU-friendly, lane-dense layout."""
    S = _band_selector(W)
    wbands, scales, shifts, biases = [], [], [], []
    for blk in raw_params:
        for tag in ('1', '2'):
            g = blk[f'bn{tag}_gamma']
            be = blk[f'bn{tag}_beta']
            mu = blk[f'bn{tag}_mean']
            var = blk[f'bn{tag}_var']
            C = g.shape[0]
            Cp = c_pad
            sc = g / jnp.sqrt(var + BN_EPS)                       # (C,)
            sh = be - mu * sc
            pad = jnp.zeros((Cp - C,), jnp.float32)
            sc_p = jnp.concatenate([sc, pad])                     # pad -> 0
            sh_p = jnp.concatenate([sh, pad])
            b_p = jnp.concatenate([blk[f'conv{tag}_b'], pad])
            scales.append(jnp.tile(sc_p, W)[None, :])             # (1, W*Cp)
            shifts.append(jnp.tile(sh_p, W)[None, :])
            biases.append(jnp.tile(b_p, W)[None, :])
            # OIHW -> (kh, kw, ci, co), zero-pad channels, band over (wi, w).
            wt = jnp.transpose(blk[f'conv{tag}_w'], (2, 3, 1, 0))  # (3,3,C,C)
            wt = jnp.pad(wt, ((0, 0), (0, 0), (0, Cp - C), (0, Cp - C)))
            wb = jnp.einsum('dxw,kdio->kxiwo', S, wt)   # (3, W, Cp, W, Cp)
            wbands.append(wb.reshape(3, W * Cp, W * Cp))
    return (jnp.stack(wbands).astype(jnp.bfloat16),   # (n_conv, 3, WCp, WCp)
            jnp.stack(scales).astype(jnp.float32),    # (n_conv, 1, WCp)
            jnp.stack(shifts).astype(jnp.float32),    # (n_conv, 1, WCp)
            jnp.stack(biases).astype(jnp.float32))    # (n_conv, 1, WCp)


# ----------------------------------------------------------------------------
# Pure-JAX reference (lax.conv, highest precision) for validation
# ----------------------------------------------------------------------------
def ref_resbottleneck(x, raw_params):
    for blk in raw_params:
        h = x
        for tag in ('1', '2'):
            g = blk[f'bn{tag}_gamma'][None, :, None, None]
            be = blk[f'bn{tag}_beta'][None, :, None, None]
            mu = blk[f'bn{tag}_mean'][None, :, None, None]
            var = blk[f'bn{tag}_var'][None, :, None, None]
            h = (h - mu) * lax.rsqrt(var + BN_EPS) * g + be
            h = jnp.maximum(h, 0.0)
            h = lax.conv_general_dilated(
                h, blk[f'conv{tag}_w'], window_strides=(1, 1), padding='SAME',
                dimension_numbers=('NCHW', 'OIHW', 'NCHW'),
                precision=lax.Precision.HIGHEST)
            h = h + blk[f'conv{tag}_b'][None, :, None, None]
        x = x + h
    return x


# ----------------------------------------------------------------------------
# Deterministic synthetic parameters
# ----------------------------------------------------------------------------
def make_params(key, channels, block_nums):
    params = []
    for _ in range(block_nums):
        keys = jax.random.split(key, 13)
        key = keys[0]
        blk = {}
        for idx, tag in enumerate(('1', '2')):
            o = 1 + idx * 6
            blk[f'conv{tag}_w'] = 0.1 * jax.random.normal(
                keys[o], (channels, channels, 3, 3), jnp.float32)
            blk[f'conv{tag}_b'] = 0.1 * jax.random.normal(
                keys[o + 1], (channels,), jnp.float32)
            blk[f'bn{tag}_gamma'] = 1.0 + 0.1 * jax.random.normal(
                keys[o + 2], (channels,), jnp.float32)
            blk[f'bn{tag}_beta'] = 0.1 * jax.random.normal(
                keys[o + 3], (channels,), jnp.float32)
            blk[f'bn{tag}_mean'] = 0.1 * jax.random.normal(
                keys[o + 4], (channels,), jnp.float32)
            blk[f'bn{tag}_var'] = jax.random.uniform(
                keys[o + 5], (channels,), jnp.float32, 0.5, 1.5)
        params.append(blk)
    return params


if __name__ == "__main__":
    in_channels = 4
    block_nums = 2
    B, H, W = 2, 16, 16
    C_PAD = 8                      # pad channels so W * C_PAD = 128 lanes

    key = jax.random.PRNGKey(0)
    k_x, k_p = jax.random.split(key)
    x = jax.random.normal(k_x, (B, in_channels, H, W), jnp.float32)
    raw = make_params(k_p, in_channels, block_nums)

    # Weight/BN layout prep done once, outside the jitted forward.
    wband, bn_scale, bn_shift, bias = prepare_params(raw, W, C_PAD)

    fwd = jax.jit(functools.partial(resbottleneck_forward,
                                    block_nums=block_nums, c_pad=C_PAD))
    out = jax.block_until_ready(fwd(x, wband, bn_scale, bn_shift, bias))

    ref = jax.block_until_ready(ref_resbottleneck(x, raw))
    assert out.shape == (B, in_channels, H, W)
    max_err = float(jnp.max(jnp.abs(out - ref)))
    # bf16 MXU operands (f32 accumulate) -> bf16-class tolerance.
    assert max_err < 5e-2, f"max_err={max_err}"
    print("KERNEL_OK")
</pallas_src>

<mosaic_0001>
module attributes {stable_mosaic.version = 11 : i64} {
  func.func @_resbottleneck_kernel(%arg0: i32, %arg1: memref<1x16x128xf32, #tpu.memory_space<vmem>>, %arg2: memref<4x3x128x128xbf16, #tpu.memory_space<vmem>>, %arg3: memref<4x1x128xf32, #tpu.memory_space<vmem>>, %arg4: memref<4x1x128xf32, #tpu.memory_space<vmem>>, %arg5: memref<4x1x128xf32, #tpu.memory_space<vmem>>, %arg6: memref<1x16x128xf32, #tpu.memory_space<vmem>>) attributes {dimension_semantics = [#tpu.dimension_semantics<parallel>], iteration_bounds = array<i64: 2>, scalar_prefetch = 0 : i64, scratch_operands = 0 : i64, tpu.core_type = #tpu.core_type<tc>, window_params = [{transform_indices = @transform_0, window_bounds = array<i64: 1, 16, 128>}, {pipeline_mode = #tpu.pipeline_mode<synchronous>, transform_indices = @transform_1, window_bounds = array<i64: 4, 3, 128, 128>}, {pipeline_mode = #tpu.pipeline_mode<synchronous>, transform_indices = @transform_2, window_bounds = array<i64: 4, 1, 128>}, {pipeline_mode = #tpu.pipeline_mode<synchronous>, transform_indices = @transform_3, window_bounds = array<i64: 4, 1, 128>}, {pipeline_mode = #tpu.pipeline_mode<synchronous>, transform_indices = @transform_4, window_bounds = array<i64: 4, 1, 128>}, {transform_indices = @transform_5, window_bounds = array<i64: 1, 16, 128>}]} {
    %c0 = arith.constant 0 : index
    %c0_0 = arith.constant 0 : index
    %c0_1 = arith.constant 0 : index
    %0 = vector.load %arg1[%c0, %c0_0, %c0_1] : memref<1x16x128xf32, #tpu.memory_space<vmem>>, vector<1x16x128xf32>
    %cst = arith.constant 0.000000e+00 : bf16
    %1 = vector.broadcast %cst : bf16 to vector<1x1x128xbf16>
    %c0_2 = arith.constant 0 : index
    %c0_3 = arith.constant 0 : index
    %c0_4 = arith.constant 0 : index
    %2 = vector.load %arg3[%c0_2, %c0_3, %c0_4] : memref<4x1x128xf32, #tpu.memory_space<vmem>>, vector<1x1x128xf32>
    %3 = vector.shape_cast %2 : vector<1x1x128xf32> to vector<1x128xf32>
    %4 = vector.shape_cast %3 : vector<1x128xf32> to vector<1x1x128xf32>
    %5 = vector.broadcast %4 : vector<1x1x128xf32> to vector<1x16x128xf32>
    %6 = arith.mulf %0, %5 : vector<1x16x128xf32>
    %c0_5 = arith.constant 0 : index
    %c0_6 = arith.constant 0 : index
    %c0_7 = arith.constant 0 : index
    %7 = vector.load %arg4[%c0_5, %c0_6, %c0_7] : memref<4x1x128xf32, #tpu.memory_space<vmem>>, vector<1x1x128xf32>
    %8 = vector.shape_cast %7 : vector<1x1x128xf32> to vector<1x128xf32>
    %9 = vector.shape_cast %8 : vector<1x128xf32> to vector<1x1x128xf32>
    %10 = vector.broadcast %9 : vector<1x1x128xf32> to vector<1x16x128xf32>
    %11 = arith.addf %6, %10 : vector<1x16x128xf32>
    %cst_8 = arith.constant 0.000000e+00 : f32
    %12 = vector.broadcast %cst_8 : f32 to vector<1x16x128xf32>
    %13 = arith.maximumf %11, %12 : vector<1x16x128xf32>
    %14 = arith.truncf %13 : vector<1x16x128xf32> to vector<1x16x128xbf16>
    %15 = vector.extract_strided_slice %14 {offsets = [0, 0, 0], sizes = [1, 15, 128], strides = [1, 1, 1]} : vector<1x16x128xbf16> to vector<1x15x128xbf16>
    %16 = tpu.concatenate %1, %15 in 1 : vector<1x1x128xbf16>, vector<1x15x128xbf16> -> vector<1x16x128xbf16>
    %17 = vector.extract_strided_slice %14 {offsets = [0, 1, 0], sizes = [1, 15, 128], strides = [1, 1, 1]} : vector<1x16x128xbf16> to vector<1x15x128xbf16>
    %18 = tpu.concatenate %17, %1 in 1 : vector<1x15x128xbf16>, vector<1x1x128xbf16> -> vector<1x16x128xbf16>
    %19 = vector.shape_cast %16 : vector<1x16x128xbf16> to vector<16x128xbf16>
    %c0_9 = arith.constant 0 : index
    %c0_10 = arith.constant 0 : index
    %c0_11 = arith.constant 0 : index
    %c0_12 = arith.constant 0 : index
    %20 = vector.load %arg2[%c0_9, %c0_10, %c0_11, %c0_12] : memref<4x3x128x128xbf16, #tpu.memory_space<vmem>>, vector<1x1x128x128xbf16>
    %21 = vector.shape_cast %20 : vector<1x1x128x128xbf16> to vector<128x128xbf16>
    %cst_13 = arith.constant dense<0.000000e+00> : vector<16x128xf32>
    %22 = tpu.matmul %19, %21, %cst_13 {dimension_numbers = #tpu.dot_dimension_numbers<[1], [0], [0], [1], [0, 0, 1, 1], [], []>} : vector<16x128xbf16>, vector<128x128xbf16>, vector<16x128xf32> -> vector<16x128xf32>
    %23 = vector.shape_cast %14 : vector<1x16x128xbf16> to vector<16x128xbf16>
    %c0_14 = arith.constant 0 : index
    %c1 = arith.constant 1 : index
    %c0_15 = arith.constant 0 : index
    %c0_16 = arith.constant 0 : index
    %24 = vector.load %arg2[%c0_14, %c1, %c0_15, %c0_16] : memref<4x3x128x128xbf16, #tpu.memory_space<vmem>>, vector<1x1x128x128xbf16>
    %25 = vector.shape_cast %24 : vector<1x1x128x128xbf16> to vector<128x128xbf16>
    %cst_17 = arith.constant dense<0.000000e+00> : vector<16x128xf32>
    %26 = tpu.matmul %23, %25, %cst_17 {dimension_numbers = #tpu.dot_dimension_numbers<[1], [0], [0], [1], [0, 0, 1, 1], [], []>} : vector<16x128xbf16>, vector<128x128xbf16>, vector<16x128xf32> -> vector<16x128xf32>
    %27 = arith.addf %22, %26 : vector<16x128xf32>
    %28 = vector.shape_cast %18 : vector<1x16x128xbf16> to vector<16x128xbf16>
    %c0_18 = arith.constant 0 : index
    %c2 = arith.constant 2 : index
    %c0_19 = arith.constant 0 : index
    %c0_20 = arith.constant 0 : index
    %29 = vector.load %arg2[%c0_18, %c2, %c0_19, %c0_20] : memref<4x3x128x128xbf16, #tpu.memory_space<vmem>>, vector<1x1x128x128xbf16>
    %30 = vector.shape_cast %29 : vector<1x1x128x128xbf16> to vector<128x128xbf16>
    %cst_21 = arith.constant dense<0.000000e+00> : vector<16x128xf32>
    %31 = tpu.matmul %28, %30, %cst_21 {dimension_numbers = #tpu.dot_dimension_numbers<[1], [0], [0], [1], [0, 0, 1, 1], [], []>} : vector<16x128xbf16>, vector<128x128xbf16>, vector<16x128xf32> -> vector<16x128xf32>
    %32 = arith.addf %27, %31 : vector<16x128xf32>
    %c0_22 = arith.constant 0 : index
    %c0_23 = arith.constant 0 : index
    %c0_24 = arith.constant 0 : index
    %33 = vector.load %arg5[%c0_22, %c0_23, %c0_24] : memref<4x1x128xf32, #tpu.memory_space<vmem>>, vector<1x1x128xf32>
    %34 = vector.shape_cast %33 : vector<1x1x128xf32> to vector<1x128xf32>
    %35 = vector.broadcast %34 : vector<1x128xf32> to vector<16x128xf32>
    %36 = arith.addf %32, %35 : vector<16x128xf32>
    %37 = vector.shape_cast %36 : vector<16x128xf32> to vector<1x16x128xf32>
    %c1_25 = arith.constant 1 : index
    %c0_26 = arith.constant 0 : index
    %c0_27 = arith.constant 0 : index
    %38 = vector.load %arg3[%c1_25, %c0_26, %c0_27] : memref<4x1x128xf32, #tpu.memory_space<vmem>>, vector<1x1x128xf32>
    %39 = vector.shape_cast %38 : vector<1x1x128xf32> to vector<1x128xf32>
    %40 = vector.shape_cast %39 : vector<1x128xf32> to vector<1x1x128xf32>
    %41 = vector.broadcast %40 : vector<1x1x128xf32> to vector<1x16x128xf32>
    %42 = arith.mulf %37, %41 : vector<1x16x128xf32>
    %c1_28 = arith.constant 1 : index
    %c0_29 = arith.constant 0 : index
    %c0_30 = arith.constant 0 : index
    %43 = vector.load %arg4[%c1_28, %c0_29, %c0_30] : memref<4x1x128xf32, #tpu.memory_space<vmem>>, vector<1x1x128xf32>
    %44 = vector.shape_cast %43 : vector<1x1x128xf32> to vector<1x128xf32>
    %45 = vector.shape_cast %44 : vector<1x128xf32> to vector<1x1x128xf32>
    %46 = vector.broadcast %45 : vector<1x1x128xf32> to vector<1x16x128xf32>
    %47 = arith.addf %42, %46 : vector<1x16x128xf32>
    %cst_31 = arith.constant 0.000000e+00 : f32
    %48 = vector.broadcast %cst_31 : f32 to vector<1x16x128xf32>
    %49 = arith.maximumf %47, %48 : vector<1x16x128xf32>
    %50 = arith.truncf %49 : vector<1x16x128xf32> to vector<1x16x128xbf16>
    %51 = vector.extract_strided_slice %50 {offsets = [0, 0, 0], sizes = [1, 15, 128], strides = [1, 1, 1]} : vector<1x16x128xbf16> to vector<1x15x128xbf16>
    %52 = tpu.concatenate %1, %51 in 1 : vector<1x1x128xbf16>, vector<1x15x128xbf16> -> vector<1x16x128xbf16>
    %53 = vector.extract_strided_slice %50 {offsets = [0, 1, 0], sizes = [1, 15, 128], strides = [1, 1, 1]} : vector<1x16x128xbf16> to vector<1x15x128xbf16>
    %54 = tpu.concatenate %53, %1 in 1 : vector<1x15x128xbf16>, vector<1x1x128xbf16> -> vector<1x16x128xbf16>
    %55 = vector.shape_cast %52 : vector<1x16x128xbf16> to vector<16x128xbf16>
    %c1_32 = arith.constant 1 : index
    %c0_33 = arith.constant 0 : index
    %c0_34 = arith.constant 0 : index
    %c0_35 = arith.constant 0 : index
    %56 = vector.load %arg2[%c1_32, %c0_33, %c0_34, %c0_35] : memref<4x3x128x128xbf16, #tpu.memory_space<vmem>>, vector<1x1x128x128xbf16>
    %57 = vector.shape_cast %56 : vector<1x1x128x128xbf16> to vector<128x128xbf16>
    %cst_36 = arith.constant dense<0.000000e+00> : vector<16x128xf32>
    %58 = tpu.matmul %55, %57, %cst_36 {dimension_numbers = #tpu.dot_dimension_numbers<[1], [0], [0], [1], [0, 0, 1, 1], [], []>} : vector<16x128xbf16>, vector<128x128xbf16>, vector<16x128xf32> -> vector<16x128xf32>
    %59 = vector.shape_cast %50 : vector<1x16x128xbf16> to vector<16x128xbf16>
    %c1_37 = arith.constant 1 : index
    %c1_38 = arith.constant 1 : index
    %c0_39 = arith.constant 0 : index
    %c0_40 = arith.constant 0 : index
    %60 = vector.load %arg2[%c1_37, %c1_38, %c0_39, %c0_40] : memref<4x3x128x128xbf16, #tpu.memory_space<vmem>>, vector<1x1x128x128xbf16>
    %61 = vector.shape_cast %60 : vector<1x1x128x128xbf16> to vector<128x128xbf16>
    %cst_41 = arith.constant dense<0.000000e+00> : vector<16x128xf32>
    %62 = tpu.matmul %59, %61, %cst_41 {dimension_numbers = #tpu.dot_dimension_numbers<[1], [0], [0], [1], [0, 0, 1, 1], [], []>} : vector<16x128xbf16>, vector<128x128xbf16>, vector<16x128xf32> -> vector<16x128xf32>
    %63 = arith.addf %58, %62 : vector<16x128xf32>
    %64 = vector.shape_cast %54 : vector<1x16x128xbf16> to vector<16x128xbf16>
    %c1_42 = arith.constant 1 : index
    %c2_43 = arith.constant 2 : index
    %c0_44 = arith.constant 0 : index
    %c0_45 = arith.constant 0 : index
    %65 = vector.load %arg2[%c1_42, %c2_43, %c0_44, %c0_45] : memref<4x3x128x128xbf16, #tpu.memory_space<vmem>>, vector<1x1x128x128xbf16>
    %66 = vector.shape_cast %65 : vector<1x1x128x128xbf16> to vector<128x128xbf16>
    %cst_46 = arith.constant dense<0.000000e+00> : vector<16x128xf32>
    %67 = tpu.matmul %64, %66, %cst_46 {dimension_numbers = #tpu.dot_dimension_numbers<[1], [0], [0], [1], [0, 0, 1, 1], [], []>} : vector<16x128xbf16>, vector<128x128xbf16>, vector<16x128xf32> -> vector<16x128xf32>
    %68 = arith.addf %63, %67 : vector<16x128xf32>
    %c1_47 = arith.constant 1 : index
    %c0_48 = arith.constant 0 : index
    %c0_49 = arith.constant 0 : index
    %69 = vector.load %arg5[%c1_47, %c0_48, %c0_49] : memref<4x1x128xf32, #tpu.memory_space<vmem>>, vector<1x1x128xf32>
    %70 = vector.shape_cast %69 : vector<1x1x128xf32> to vector<1x128xf32>
    %71 = vector.broadcast %70 : vector<1x128xf32> to vector<16x128xf32>
    %72 = arith.addf %68, %71 : vector<16x128xf32>
    %73 = vector.shape_cast %72 : vector<16x128xf32> to vector<1x16x128xf32>
    %74 = arith.addf %73, %0 : vector<1x16x128xf32>
    %c2_50 = arith.constant 2 : index
    %c0_51 = arith.constant 0 : index
    %c0_52 = arith.constant 0 : index
    %75 = vector.load %arg3[%c2_50, %c0_51, %c0_52] : memref<4x1x128xf32, #tpu.memory_space<vmem>>, vector<1x1x128xf32>
    %76 = vector.shape_cast %75 : vector<1x1x128xf32> to vector<1x128xf32>
    %77 = vector.shape_cast %76 : vector<1x128xf32> to vector<1x1x128xf32>
    %78 = vector.broadcast %77 : vector<1x1x128xf32> to vector<1x16x128xf32>
    %79 = arith.mulf %74, %78 : vector<1x16x128xf32>
    %c2_53 = arith.constant 2 : index
    %c0_54 = arith.constant 0 : index
    %c0_55 = arith.constant 0 : index
    %80 = vector.load %arg4[%c2_53, %c0_54, %c0_55] : memref<4x1x128xf32, #tpu.memory_space<vmem>>, vector<1x1x128xf32>
    %81 = vector.shape_cast %80 : vector<1x1x128xf32> to vector<1x128xf32>
    %82 = vector.shape_cast %81 : vector<1x128xf32> to vector<1x1x128xf32>
    %83 = vector.broadcast %82 : vector<1x1x128xf32> to vector<1x16x128xf32>
    %84 = arith.addf %79, %83 : vector<1x16x128xf32>
    %cst_56 = arith.constant 0.000000e+00 : f32
    %85 = vector.broadcast %cst_56 : f32 to vector<1x16x128xf32>
    %86 = arith.maximumf %84, %85 : vector<1x16x128xf32>
    %87 = arith.truncf %86 : vector<1x16x128xf32> to vector<1x16x128xbf16>
    %88 = vector.extract_strided_slice %87 {offsets = [0, 0, 0], sizes = [1, 15, 128], strides = [1, 1, 1]} : vector<1x16x128xbf16> to vector<1x15x128xbf16>
    %89 = tpu.concatenate %1, %88 in 1 : vector<1x1x128xbf16>, vector<1x15x128xbf16> -> vector<1x16x128xbf16>
    %90 = vector.extract_strided_slice %87 {offsets = [0, 1, 0], sizes = [1, 15, 128], strides = [1, 1, 1]} : vector<1x16x128xbf16> to vector<1x15x128xbf16>
    %91 = tpu.concatenate %90, %1 in 1 : vector<1x15x128xbf16>, vector<1x1x128xbf16> -> vector<1x16x128xbf16>
    %92 = vector.shape_cast %89 : vector<1x16x128xbf16> to vector<16x128xbf16>
    %c2_57 = arith.constant 2 : index
    %c0_58 = arith.constant 0 : index
    %c0_59 = arith.constant 0 : index
    %c0_60 = arith.constant 0 : index
    %93 = vector.load %arg2[%c2_57, %c0_58, %c0_59, %c0_60] : memref<4x3x128x128xbf16, #tpu.memory_space<vmem>>, vector<1x1x128x128xbf16>
    %94 = vector.shape_cast %93 : vector<1x1x128x128xbf16> to vector<128x128xbf16>
    %cst_61 = arith.constant dense<0.000000e+00> : vector<16x128xf32>
    %95 = tpu.matmul %92, %94, %cst_61 {dimension_numbers = #tpu.dot_dimension_numbers<[1], [0], [0], [1], [0, 0, 1, 1], [], []>} : vector<16x128xbf16>, vector<128x128xbf16>, vector<16x128xf32> -> vector<16x128xf32>
    %96 = vector.shape_cast %87 : vector<1x16x128xbf16> to vector<16x128xbf16>
    %c2_62 = arith.constant 2 : index
    %c1_63 = arith.constant 1 : index
    %c0_64 = arith.constant 0 : index
    %c0_65 = arith.constant 0 : index
    %97 = vector.load %arg2[%c2_62, %c1_63, %c0_64, %c0_65] : memref<4x3x128x128xbf16, #tpu.memory_space<vmem>>, vector<1x1x128x128xbf16>
    %98 = vector.shape_cast %97 : vector<1x1x128x128xbf16> to vector<128x128xbf16>
    %cst_66 = arith.constant dense<0.000000e+00> : vector<16x128xf32>
    %99 = tpu.matmul %96, %98, %cst_66 {dimension_numbers = #tpu.dot_dimension_numbers<[1], [0], [0], [1], [0, 0, 1, 1], [], []>} : vector<16x128xbf16>, vector<128x128xbf16>, vector<16x128xf32> -> vector<16x128xf32>
    %100 = arith.addf %95, %99 : vector<16x128xf32>
    %101 = vector.shape_cast %91 : vector<1x16x128xbf16> to vector<16x128xbf16>
    %c2_67 = arith.constant 2 : index
    %c2_68 = arith.constant 2 : index
    %c0_69 = arith.constant 0 : index
    %c0_70 = arith.constant 0 : index
    %102 = vector.load %arg2[%c2_67, %c2_68, %c0_69, %c0_70] : memref<4x3x128x128xbf16, #tpu.memory_space<vmem>>, vector<1x1x128x128xbf16>
    %103 = vector.shape_cast %102 : vector<1x1x128x128xbf16> to vector<128x128xbf16>
    %cst_71 = arith.constant dense<0.000000e+00> : vector<16x128xf32>
    %104 = tpu.matmul %101, %103, %cst_71 {dimension_numbers = #tpu.dot_dimension_numbers<[1], [0], [0], [1], [0, 0, 1, 1], [], []>} : vector<16x128xbf16>, vector<128x128xbf16>, vector<16x128xf32> -> vector<16x128xf32>
    %105 = arith.addf %100, %104 : vector<16x128xf32>
    %c2_72 = arith.constant 2 : index
    %c0_73 = arith.constant 0 : index
    %c0_74 = arith.constant 0 : index
    %106 = vector.load %arg5[%c2_72, %c0_73, %c0_74] : memref<4x1x128xf32, #tpu.memory_space<vmem>>, vector<1x1x128xf32>
    %107 = vector.shape_cast %106 : vector<1x1x128xf32> to vector<1x128xf32>
    %108 = vector.broadcast %107 : vector<1x128xf32> to vector<16x128xf32>
    %109 = arith.addf %105, %108 : vector<16x128xf32>
    %110 = vector.shape_cast %109 : vector<16x128xf32> to vector<1x16x128xf32>
    %c3 = arith.constant 3 : index
    %c0_75 = arith.constant 0 : index
    %c0_76 = arith.constant 0 : index
    %111 = vector.load %arg3[%c3, %c0_75, %c0_76] : memref<4x1x128xf32, #tpu.memory_space<vmem>>, vector<1x1x128xf32>
    %112 = vector.shape_cast %111 : vector<1x1x128xf32> to vector<1x128xf32>
    %113 = vector.shape_cast %112 : vector<1x128xf32> to vector<1x1x128xf32>
    %114 = vector.broadcast %113 : vector<1x1x128xf32> to vector<1x16x128xf32>
    %115 = arith.mulf %110, %114 : vector<1x16x128xf32>
    %c3_77 = arith.constant 3 : index
    %c0_78 = arith.constant 0 : index
    %c0_79 = arith.constant 0 : index
    %116 = vector.load %arg4[%c3_77, %c0_78, %c0_79] : memref<4x1x128xf32, #tpu.memory_space<vmem>>, vector<1x1x128xf32>
    %117 = vector.shape_cast %116 : vector<1x1x128xf32> to vector<1x128xf32>
    %118 = vector.shape_cast %117 : vector<1x128xf32> to vector<1x1x128xf32>
    %119 = vector.broadcast %118 : vector<1x1x128xf32> to vector<1x16x128xf32>
    %120 = arith.addf %115, %119 : vector<1x16x128xf32>
    %cst_80 = arith.constant 0.000000e+00 : f32
    %121 = vector.broadcast %cst_80 : f32 to vector<1x16x128xf32>
    %122 = arith.maximumf %120, %121 : vector<1x16x128xf32>
    %123 = arith.truncf %122 : vector<1x16x128xf32> to vector<1x16x128xbf16>
    %124 = vector.extract_strided_slice %123 {offsets = [0, 0, 0], sizes = [1, 15, 128], strides = [1, 1, 1]} : vector<1x16x128xbf16> to vector<1x15x128xbf16>
    %125 = tpu.concatenate %1, %124 in 1 : vector<1x1x128xbf16>, vector<1x15x128xbf16> -> vector<1x16x128xbf16>
    %126 = vector.extract_strided_slice %123 {offsets = [0, 1, 0], sizes = [1, 15, 128], strides = [1, 1, 1]} : vector<1x16x128xbf16> to vector<1x15x128xbf16>
    %127 = tpu.concatenate %126, %1 in 1 : vector<1x15x128xbf16>, vector<1x1x128xbf16> -> vector<1x16x128xbf16>
    %128 = vector.shape_cast %125 : vector<1x16x128xbf16> to vector<16x128xbf16>
    %c3_81 = arith.constant 3 : index
    %c0_82 = arith.constant 0 : index
    %c0_83 = arith.constant 0 : index
    %c0_84 = arith.constant 0 : index
    %129 = vector.load %arg2[%c3_81, %c0_82, %c0_83, %c0_84] : memref<4x3x128x128xbf16, #tpu.memory_space<vmem>>, vector<1x1x128x128xbf16>
    %130 = vector.shape_cast %129 : vector<1x1x128x128xbf16> to vector<128x128xbf16>
    %cst_85 = arith.constant dense<0.000000e+00> : vector<16x128xf32>
    %131 = tpu.matmul %128, %130, %cst_85 {dimension_numbers = #tpu.dot_dimension_numbers<[1], [0], [0], [1], [0, 0, 1, 1], [], []>} : vector<16x128xbf16>, vector<128x128xbf16>, vector<16x128xf32> -> vector<16x128xf32>
    %132 = vector.shape_cast %123 : vector<1x16x128xbf16> to vector<16x128xbf16>
    %c3_86 = arith.constant 3 : index
    %c1_87 = arith.constant 1 : index
    %c0_88 = arith.constant 0 : index
    %c0_89 = arith.constant 0 : index
    %133 = vector.load %arg2[%c3_86, %c1_87, %c0_88, %c0_89] : memref<4x3x128x128xbf16, #tpu.memory_space<vmem>>, vector<1x1x128x128xbf16>
    %134 = vector.shape_cast %133 : vector<1x1x128x128xbf16> to vector<128x128xbf16>
    %cst_90 = arith.constant dense<0.000000e+00> : vector<16x128xf32>
    %135 = tpu.matmul %132, %134, %cst_90 {dimension_numbers = #tpu.dot_dimension_numbers<[1], [0], [0], [1], [0, 0, 1, 1], [], []>} : vector<16x128xbf16>, vector<128x128xbf16>, vector<16x128xf32> -> vector<16x128xf32>
    %136 = arith.addf %131, %135 : vector<16x128xf32>
    %137 = vector.shape_cast %127 : vector<1x16x128xbf16> to vector<16x128xbf16>
    %c3_91 = arith.constant 3 : index
    %c2_92 = arith.constant 2 : index
    %c0_93 = arith.constant 0 : index
    %c0_94 = arith.constant 0 : index
    %138 = vector.load %arg2[%c3_91, %c2_92, %c0_93, %c0_94] : memref<4x3x128x128xbf16, #tpu.memory_space<vmem>>, vector<1x1x128x128xbf16>
    %139 = vector.shape_cast %138 : vector<1x1x128x128xbf16> to vector<128x128xbf16>
    %cst_95 = arith.constant dense<0.000000e+00> : vector<16x128xf32>
    %140 = tpu.matmul %137, %139, %cst_95 {dimension_numbers = #tpu.dot_dimension_numbers<[1], [0], [0], [1], [0, 0, 1, 1], [], []>} : vector<16x128xbf16>, vector<128x128xbf16>, vector<16x128xf32> -> vector<16x128xf32>
    %141 = arith.addf %136, %140 : vector<16x128xf32>
    %c3_96 = arith.constant 3 : index
    %c0_97 = arith.constant 0 : index
    %c0_98 = arith.constant 0 : index
    %142 = vector.load %arg5[%c3_96, %c0_97, %c0_98] : memref<4x1x128xf32, #tpu.memory_space<vmem>>, vector<1x1x128xf32>
    %143 = vector.shape_cast %142 : vector<1x1x128xf32> to vector<1x128xf32>
    %144 = vector.broadcast %143 : vector<1x128xf32> to vector<16x128xf32>
    %145 = arith.addf %141, %144 : vector<16x128xf32>
    %146 = vector.shape_cast %145 : vector<16x128xf32> to vector<1x16x128xf32>
    %147 = arith.addf %146, %74 : vector<1x16x128xf32>
    %c0_99 = arith.constant 0 : index
    %c0_100 = arith.constant 0 : index
    %c0_101 = arith.constant 0 : index
    %148 = vector.load %arg6[%c0_99, %c0_100, %c0_101] : memref<1x16x128xf32, #tpu.memory_space<vmem>>, vector<1x16x128xf32>
    tpu.vector_store %arg6[%c0_99, %c0_100, %c0_101], %147 {strides = array<i32>} : memref<1x16x128xf32, #tpu.memory_space<vmem>>, vector<1x16x128xf32>,
    return
  }
  func.func @transform_0(%arg0: i32) -> (i32, i32, i32) {
    %c0_i32 = arith.constant 0 : i32
    %c0_i32_0 = arith.constant 0 : i32
    %c0_i32_1 = arith.constant 0 : i32
    return %arg0, %c0_i32, %c0_i32_0 : i32, i32, i32
  }
  func.func @transform_1(%arg0: i32) -> (i32, i32, i32, i32) {
    %c0_i32 = arith.constant 0 : i32
    %c0_i32_0 = arith.constant 0 : i32
    %c0_i32_1 = arith.constant 0 : i32
    %c0_i32_2 = arith.constant 0 : i32
    %c0_i32_3 = arith.constant 0 : i32
    return %c0_i32, %c0_i32_0, %c0_i32_1, %c0_i32_2 : i32, i32, i32, i32
  }
  func.func @transform_2(%arg0: i32) -> (i32, i32, i32) {
    %c0_i32 = arith.constant 0 : i32
    %c0_i32_0 = arith.constant 0 : i32
    %c0_i32_1 = arith.constant 0 : i32
    %c0_i32_2 = arith.constant 0 : i32
    return %c0_i32, %c0_i32_0, %c0_i32_1 : i32, i32, i32
  }
  func.func @transform_3(%arg0: i32) -> (i32, i32, i32) {
    %c0_i32 = arith.constant 0 : i32
    %c0_i32_0 = arith.constant 0 : i32
    %c0_i32_1 = arith.constant 0 : i32
    %c0_i32_2 = arith.constant 0 : i32
    return %c0_i32, %c0_i32_0, %c0_i32_1 : i32, i32, i32
  }
  func.func @transform_4(%arg0: i32) -> (i32, i32, i32) {
    %c0_i32 = arith.constant 0 : i32
    %c0_i32_0 = arith.constant 0 : i32
    %c0_i32_1 = arith.constant 0 : i32
    %c0_i32_2 = arith.constant 0 : i32
    return %c0_i32, %c0_i32_0, %c0_i32_1 : i32, i32, i32
  }
  func.func @transform_5(%arg0: i32) -> (i32, i32, i32) {
    %c0_i32 = arith.constant 0 : i32
    %c0_i32_0 = arith.constant 0 : i32
    %c0_i32_1 = arith.constant 0 : i32
    return %arg0, %c0_i32, %c0_i32_0 : i32, i32, i32
  }
}

</mosaic_0001>

<llo_original>
// kernel: resbottleneck_forward.1
$region0: #{resbottleneck_forward.1}
  #allocation0 [shape = 'u32[]', space=smem, size = 0x4, offset = 0x4, fixed_abs, tag = 'smem constant byte address 0x4 - core index']
  #allocation1 [shape = 'u32[144,128]{1,0:T(1,128)}', space=vmem, size = 0x12000, scoped, tag = 'internal scratch']
  %s0 = inlined_call_operand.vmem [shape: f32[2,16,128], index: 0, kind: input, shape index: {}]
  %s1 = inlined_call_operand.vmem [shape: bf16[4,3,128,128], index: 1, kind: input, shape index: {}]
  %s2 = inlined_call_operand.vmem [shape: f32[4,1,128], index: 2, kind: input, shape index: {}]
  %s3 = inlined_call_operand.vmem [shape: f32[4,1,128], index: 3, kind: input, shape index: {}]
  %s4 = inlined_call_operand.vmem [shape: f32[4,1,128], index: 4, kind: input, shape index: {}]
  %s5 = inlined_call_operand.vmem [shape: f32[2,16,128], index: 5, kind: output, shape index: {}]
  %s6 = sld [smem:[#allocation0]]
  $region53: #{resbottleneck_forward.1} parent=0
    _
  %s8 = ssub.s32 1, %s6
  %s9 = scalar_select 0, %s8, %s6
  loop: start=0, step=1, limit=4
  $region2: #{resbottleneck_forward.1} parent=0 // loop_pre_header
    _
  $region3: #{resbottleneck_forward.1} parent=0 // loop_header
    %s11 = sphi 0, %s15
    %p12 = scmp.ge.s32.totalorder %s11, 4
    %s21 = sphi 0, %s23
    %s24 = sphi 0, %s21
    %s25 = sphi 0, %s24
    %s41 = sphi 0, %s25
    %s45 = sphi 0, %s45
    %s47 = sphi 0, %s45
    %s48 = sphi 0, %s47
    %s62 = sphi 0, %s48
    %s66 = sphi 0, %s66
    %s68 = sphi 0, %s66
    %s69 = sphi 0, %s68
    %s83 = sphi 0, %s69
    %s87 = sphi 0, %s87
    %s89 = sphi 0, %s87
    %s90 = sphi 0, %s89
    %s104 = sphi 0, %s90
    %s108 = sphi 0, %s108
    %s110 = sphi 0, %s108
    %s111 = sphi 0, %s110
    %s125 = sphi 0, %s111
    %s131 = sphi 0, %s133
    %s134 = sphi 0, %s131
    %s135 = sphi 0, %s134
    %s151 = sphi 0, %s135
  $region4: #{resbottleneck_forward.1} parent=0 // loop_header_branch
    %14 = sbr.rel (%p12) target = $region8
  $region5: #{resbottleneck_forward.1} parent=0 // loop_body
    %s16 = ssub.s32 %s11, 1
    %s17 = ssub.s32 %s11, 2
    %s18 = sadd.s32 %s11, 1
    %s19 = ssub.s32 %s11, %s18
    %p20 = scmp.eq.s32.totalorder %s19, 0
    %s22 = sadd.s32 %s21, 1
    %s23 = scalar_select %p20, %s21, %s22
    %p26 = pneg %p20
    %p27 = scmp.eq.s32.totalorder %s11, 1
    %p28 = por %p26, %p27
    %p29 = scmp.ne.s32.totalorder %s21, %s24
    %p30 = scmp.eq.s32.totalorder %s11, 0
    %p31 = por %p29, %p30
    %p32 = scmp.ne.s32.totalorder %s21, %s24
    %p33 = scmp.eq.s32.totalorder %s16, 1
    %p34 = por %p32, %p33
    %p35 = scmp.ne.s32.totalorder %s24, %s25
    %p36 = scmp.eq.s32.totalorder %s16, 0
    %p37 = por %p35, %p36
    %p38 = scmp.ne.s32.totalorder %s24, %s25
    %p39 = scmp.eq.s32.totalorder %s17, 1
    %p40 = por %p38, %p39
    %p42 = scmp.ne.s32.totalorder %s25, %s41
    %p43 = scmp.eq.s32.totalorder %s17, 0
    %p44 = por %p42, %p43
    %s46 = sadd.s32 %s45, 1
    %p49 = scmp.eq.s32.totalorder %s11, 1
    %p50 = scmp.ne.s32.totalorder %s45, %s47
    %p51 = scmp.eq.s32.totalorder %s11, 0
    %p52 = por %p50, %p51
    %p53 = scmp.ne.s32.totalorder %s45, %s47
    %p54 = scmp.eq.s32.totalorder %s16, 1
    %p55 = por %p53, %p54
    %p56 = scmp.ne.s32.totalorder %s47, %s48
    %p57 = scmp.eq.s32.totalorder %s16, 0
    %p58 = por %p56, %p57
    %p59 = scmp.ne.s32.totalorder %s47, %s48
    %p60 = scmp.eq.s32.totalorder %s17, 1
    %p61 = por %p59, %p60
    %p63 = scmp.ne.s32.totalorder %s48, %s62
    %p64 = scmp.eq.s32.totalorder %s17, 0
    %p65 = por %p63, %p64
    %s67 = sadd.s32 %s66, 1
    %p70 = scmp.eq.s32.totalorder %s11, 1
    %p71 = scmp.ne.s32.totalorder %s66, %s68
    %p72 = scmp.eq.s32.totalorder %s11, 0
    %p73 = por %p71, %p72
    %p74 = scmp.ne.s32.totalorder %s66, %s68
    %p75 = scmp.eq.s32.totalorder %s16, 1
    %p76 = por %p74, %p75
    %p77 = scmp.ne.s32.totalorder %s68, %s69
    %p78 = scmp.eq.s32.totalorder %s16, 0
    %p79 = por %p77, %p78
    %p80 = scmp.ne.s32.totalorder %s68, %s69
    %p81 = scmp.eq.s32.totalorder %s17, 1
    %p82 = por %p80, %p81
    %p84 = scmp.ne.s32.totalorder %s69, %s83
    %p85 = scmp.eq.s32.totalorder %s17, 0
    %p86 = por %p84, %p85
    %s88 = sadd.s32 %s87, 1
    %p91 = scmp.eq.s32.totalorder %s11, 1
    %p92 = scmp.ne.s32.totalorder %s87, %s89
    %p93 = scmp.eq.s32.totalorder %s11, 0
    %p94 = por %p92, %p93
    %p95 = scmp.ne.s32.totalorder %s87, %s89
    %p96 = scmp.eq.s32.totalorder %s16, 1
    %p97 = por %p95, %p96
    %p98 = scmp.ne.s32.totalorder %s89, %s90
    %p99 = scmp.eq.s32.totalorder %s16, 0
    %p100 = por %p98, %p99
    %p101 = scmp.ne.s32.totalorder %s89, %s90
    %p102 = scmp.eq.s32.totalorder %s17, 1
    %p103 = por %p101, %p102
    %p105 = scmp.ne.s32.totalorder %s90, %s104
    %p106 = scmp.eq.s32.totalorder %s17, 0
    %p107 = por %p105, %p106
    %s109 = sadd.s32 %s108, 1
    %p112 = scmp.eq.s32.totalorder %s11, 1
    %p113 = scmp.ne.s32.totalorder %s108, %s110
    %p114 = scmp.eq.s32.totalorder %s11, 0
    %p115 = por %p113, %p114
    %p116 = scmp.ne.s32.totalorder %s108, %s110
    %p117 = scmp.eq.s32.totalorder %s16, 1
    %p118 = por %p116, %p117
    %p119 = scmp.ne.s32.totalorder %s110, %s111
    %p120 = scmp.eq.s32.totalorder %s16, 0
    %p121 = por %p119, %p120
    %p122 = scmp.ne.s32.totalorder %s110, %s111
    %p123 = scmp.eq.s32.totalorder %s17, 1
    %p124 = por %p122, %p123
    %p126 = scmp.ne.s32.totalorder %s111, %s125
    %p127 = scmp.eq.s32.totalorder %s17, 0
    %p128 = por %p126, %p127
    %s129 = ssub.s32 %s11, %s18
    %p130 = scmp.eq.s32.totalorder %s129, 0
    %s132 = sadd.s32 %s131, 1
    %s133 = scalar_select %p130, %s131, %s132
    %p136 = pneg %p130
    %p137 = scmp.eq.s32.totalorder %s11, 1
    %p138 = por %p136, %p137
    %p139 = scmp.ne.s32.totalorder %s131, %s134
    %p140 = scmp.eq.s32.totalorder %s11, 0
    %p141 = por %p139, %p140
    %p142 = scmp.ne.s32.totalorder %s131, %s134
    %p143 = scmp.eq.s32.totalorder %s16, 1
    %p144 = por %p142, %p143
    %p145 = scmp.ne.s32.totalorder %s134, %s135
    %p146 = scmp.eq.s32.totalorder %s16, 0
    %p147 = por %p145, %p146
    %p148 = scmp.ne.s32.totalorder %s134, %s135
    %p149 = scmp.eq.s32.totalorder %s17, 1
    %p150 = por %p148, %p149
    %p152 = scmp.ne.s32.totalorder %s135, %s151
    %p153 = scmp.eq.s32.totalorder %s17, 0
    %p154 = por %p152, %p153
    %p155 = scmp.le.s32.totalorder 1, %s11
    %p156 = scmp.lt.s32.totalorder %s11, 3
    %p157 = pnand %p155, %p156
    %p158 = pneg %p157
    // Predicated region
    $region9: #{resbottleneck_forward.1} parent=5 // pred_check
      _
    $region10: #{resbottleneck_forward.1} parent=5 // pred_check_branch
      %160 = sbr.rel (%p157) target = $region12
    $region11: #{resbottleneck_forward.1} parent=5 // pred_region
      %s161 = ssub.s32 %s11, 1
      // Predicated region
      $region13: #{resbottleneck_forward.1} parent=11 // pred_check
        %p162 = pneg %p58
      $region14: #{resbottleneck_forward.1} parent=11 // pred_check_branch
        %164 = sbr.rel (%p162) target = $region16
      $region15: #{resbottleneck_forward.1} parent=11 // pred_region
        _
      $region16: #{resbottleneck_forward.1} parent=11 // pred_fallthru
        _
      // Predicated region
      $region17: #{resbottleneck_forward.1} parent=11 // pred_check
        %p165 = pneg %p79
      $region18: #{resbottleneck_forward.1} parent=11 // pred_check_branch
        %167 = sbr.rel (%p165) target = $region20
      $region19: #{resbottleneck_forward.1} parent=11 // pred_region
        _
      $region20: #{resbottleneck_forward.1} parent=11 // pred_fallthru
        _
      // Predicated region
      $region21: #{resbottleneck_forward.1} parent=11 // pred_check
        %p168 = pneg %p100
      $region22: #{resbottleneck_forward.1} parent=11 // pred_check_branch
        %170 = sbr.rel (%p168) target = $region24
      $region23: #{resbottleneck_forward.1} parent=11 // pred_region
        _
      $region24: #{resbottleneck_forward.1} parent=11 // pred_fallthru
        _
      // Predicated region
      $region25: #{resbottleneck_forward.1} parent=11 // pred_check
        %p171 = pneg %p121
      $region26: #{resbottleneck_forward.1} parent=11 // pred_check_branch
        %173 = sbr.rel (%p171) target = $region28
      $region27: #{resbottleneck_forward.1} parent=11 // pred_region
        _
      $region28: #{resbottleneck_forward.1} parent=11 // pred_fallthru
        _
    $region12: #{resbottleneck_forward.1} parent=5 // pred_fallthru
      _
    %p174 = scmp.lt.s32.totalorder %s11, 2
    // Predicated region
    $region29: #{resbottleneck_forward.1} parent=5 // pred_check
      %p175 = pneg %p174
    $region30: #{resbottleneck_forward.1} parent=5 // pred_check_branch
      %177 = sbr.rel (%p175) target = $region32
    $region31: #{resbottleneck_forward.1} parent=5 // pred_region
      // Predicated region
      $region33: #{resbottleneck_forward.1} parent=31 // pred_check
        %p178 = pneg %p31
      $region34: #{resbottleneck_forward.1} parent=31 // pred_check_branch
        %180 = sbr.rel (%p178) target = $region36
      $region35: #{resbottleneck_forward.1} parent=31 // pred_region
        %p181 = scmp.lt.s32.totalorder %s11, 1
        %s182 = scalar_select %p181, %s11, 1
        %s183 = smul.addr %s182, 2
        %s184 = smul.addr %s183, 8
        %s185 = scalar_lea.vmem %s0, %s184
      $region36: #{resbottleneck_forward.1} parent=31 // pred_fallthru
        _
    $region32: #{resbottleneck_forward.1} parent=5 // pred_fallthru
      _
    %p186 = scmp.le.s32.totalorder 1, %s11
    %p187 = scmp.lt.s32.totalorder %s11, 3
    %p188 = pnand %p186, %p187
    %p189 = pneg %p188
    // Predicated region
    $region37: #{resbottleneck_forward.1} parent=5 // pred_check
      _
    $region38: #{resbottleneck_forward.1} parent=5 // pred_check_branch
      %191 = sbr.rel (%p188) target = $region40
    $region39: #{resbottleneck_forward.1} parent=5 // pred_region
      %s192 = ssub.s32 %s11, 1
      %p193 = scmp.lt.s32.totalorder %s16, 1
      %s194 = scalar_select %p193, %s16, 1
      %s195 = smul.addr %s194, 2
      %s196 = smul.addr %s195, 8
      %s197 = scalar_lea.vmem %s0, %s196
      %p198 = pneg %p37
      %p199 = pneg %p34
      %p200 = pneg %p58
      %p201 = pneg %p55
      %p202 = pneg %p79
      %p203 = pneg %p76
      %p204 = pneg %p100
      %p205 = pneg %p97
      %p206 = pneg %p121
      %p207 = pneg %p118
      %p208 = pneg %p147
      %p209 = pneg %p144
      %p210 = scmp.lt.s32.totalorder %s16, 1
      %s211 = scalar_select %p210, %s16, 1
      %s212 = smul.addr %s211, 2
      %s213 = smul.addr %s212, 8
      %s214 = scalar_lea.vmem %s5, %s213
      %p215 = scmp.lt.s32.totalorder %s16, 1
      %s216 = scalar_select %p215, %s16, 1
      %s217 = smul.addr %s216, 2
      %s218 = smul.addr %s217, 8
      %s219 = scalar_lea.vmem %s0, %s218
      %p220 = scmp.lt.s32.totalorder %s16, 1
      %s221 = scalar_select %p220, %s16, 1
      %s222 = smul.addr %s221, 2
      %s223 = smul.addr %s222, 8
      %s224 = scalar_lea.vmem %s5, %s223
      %v226 = vld [vmem:[%s219] sm:$0xff]
      %v227 = vld [vmem:[%s219 + $0x8] sm:$0xff]
      %v228 = vld [vmem:[%s2] sm:$0x1]
      %v230 = vlaneseq
      %v231 = vshrl.u32 %v230, 7
      %v232 = vsub.s32 0, %v231
      %v233 = vrot.slane %v228, %v232
      %v235 = vmul.f32 %v226, %v233
      %v236 = vmul.f32 %v227, %v233
      %v237 = vld [vmem:[%s3] sm:$0x1]
      %v239 = vlaneseq
      %v240 = vshrl.u32 %v239, 7
      %v241 = vsub.s32 0, %v240
      %v242 = vrot.slane %v237, %v241
      %v244 = vadd.f32 %v235, %v242
      %v245 = vadd.f32 %v236, %v242
      %v246 = vmax.f32 %v244, 0.0
      %v247 = vmax.f32 %v245, 0.0
      %v248 = vpack.c.bf16 %v247, %v246
      %v250 = vshrl.u32 %v248, 16
      %v252 = vrot.slane %v250, 7
      %v253 = vshll.u32 %v248, 16
      %v255 = vor.u32 %v252, %v253
      %vm257 = vcmask 1040384
      %vm258 = vsmask.f32 256
      %vm259 = vmand %vm257, %vm258
      %v260 = vsel %vm259, 0, %v255
      %v261 = vrot.slane %v253, 1
      %v262 = vor.u32 %v250, %v261
      %vm264 = vcmask 1047552
      %vm265 = vsmask.f32 7424
      %vm266 = vmand %vm264, %vm265
      %v267 = vsel %vm266, %v262, 0
      %v268 = vld [vmem:[%s1] sm:$0xf]
      %v269 = vld [vmem:[%s1 + $0x4] sm:$0xf]
      %v270 = vld [vmem:[%s1 + $0x8] sm:$0xf]
      %v271 = vld [vmem:[%s1 + $0xc] sm:$0xf]
      %v272 = vld [vmem:[%s1 + $0x10] sm:$0xf]
      %v273 = vld [vmem:[%s1 + $0x14] sm:$0xf]
      %v274 = vld [vmem:[%s1 + $0x18] sm:$0xf]
      %v275 = vld [vmem:[%s1 + $0x1c] sm:$0xf]
      %v276 = vld [vmem:[%s1 + $0x20] sm:$0xf]
      %v277 = vld [vmem:[%s1 + $0x24] sm:$0xf]
      %v278 = vld [vmem:[%s1 + $0x28] sm:$0xf]
      %v279 = vld [vmem:[%s1 + $0x2c] sm:$0xf]
      %v280 = vld [vmem:[%s1 + $0x30] sm:$0xf]
      %v281 = vld [vmem:[%s1 + $0x34] sm:$0xf]
      %v282 = vld [vmem:[%s1 + $0x38] sm:$0xf]
      %v283 = vld [vmem:[%s1 + $0x3c] sm:$0xf]
      %s284 = scalar_lea.vmem %s1, 64
      %v285 = vld [vmem:[%s284] sm:$0xf]
      %v286 = vld [vmem:[%s284 + $0x4] sm:$0xf]
      %v287 = vld [vmem:[%s284 + $0x8] sm:$0xf]
      %v288 = vld [vmem:[%s284 + $0xc] sm:$0xf]
      %v289 = vld [vmem:[%s284 + $0x10] sm:$0xf]
      %v290 = vld [vmem:[%s284 + $0x14] sm:$0xf]
      %v291 = vld [vmem:[%s284 + $0x18] sm:$0xf]
      %v292 = vld [vmem:[%s284 + $0x1c] sm:$0xf]
      %v293 = vld [vmem:[%s284 + $0x20] sm:$0xf]
      %v294 = vld [vmem:[%s284 + $0x24] sm:$0xf]
      %v295 = vld [vmem:[%s284 + $0x28] sm:$0xf]
      %v296 = vld [vmem:[%s284 + $0x2c] sm:$0xf]
      %v297 = vld [vmem:[%s284 + $0x30] sm:$0xf]
      %v298 = vld [vmem:[%s284 + $0x34] sm:$0xf]
      %v299 = vld [vmem:[%s284 + $0x38] sm:$0xf]
      %v300 = vld [vmem:[%s284 + $0x3c] sm:$0xf]
      %v317 = vunpack.c.l.b16 %v285
      %v318 = vunpack.c.l.b16 %v286
      %v319 = vunpack.c.l.b16 %v287
      %v320 = vunpack.c.l.b16 %v288
      %v321 = vunpack.c.l.b16 %v289
      %v322 = vunpack.c.l.b16 %v290
      %v323 = vunpack.c.l.b16 %v291
      %v324 = vunpack.c.l.b16 %v292
      %v325 = vunpack.c.l.b16 %v293
      %v326 = vunpack.c.l.b16 %v294
      %v327 = vunpack.c.l.b16 %v295
      %v328 = vunpack.c.l.b16 %v296
      %v329 = vunpack.c.l.b16 %v297
      %v330 = vunpack.c.l.b16 %v298
      %v331 = vunpack.c.l.b16 %v299
      %v332 = vunpack.c.l.b16 %v300
      %v333 = vpack.c.b16 %v318, %v317
      %v334 = vpack.c.b16 %v320, %v319
      %v335 = vpack.c.b16 %v322, %v321
      %v336 = vpack.c.b16 %v324, %v323
      %v337 = vpack.c.b16 %v326, %v325
      %v338 = vpack.c.b16 %v328, %v327
      %v339 = vpack.c.b16 %v330, %v329
      %v340 = vpack.c.b16 %v332, %v331
      %349 = vmatprep.subr.bf16.mxu0 0
      %350 = vmatpush1.bf16.msra.mxu0 %v333
      %351 = vmatprep.subr.bf16.mxu0 0
      %352 = vmatpush1.bf16.msra.mxu0 %v334
      %353 = vmatprep.subr.bf16.mxu0 0
      %354 = vmatpush1.bf16.msra.mxu0 %v335
      %355 = vmatprep.subr.bf16.mxu0 0
      %356 = vmatpush1.bf16.msra.mxu0 %v336
      %357 = vmatprep.subr.bf16.mxu0 0
      %358 = vmatpush1.bf16.msra.mxu0 %v337
      %359 = vmatprep.subr.bf16.mxu0 0
      %360 = vmatpush1.bf16.msra.mxu0 %v338
      %361 = vmatprep.subr.bf16.mxu0 0
      %362 = vmatpush1.bf16.msra.mxu0 %v339
      %363 = vmatprep.subr.bf16.mxu0 0
      %364 = vmatpush1.bf16.msra.mxu0 %v340
      %365 = vmatprep.subr.bf16.mxu0 0
      %366 = vmatpush1.bf16.msra.mxu0 0
      %367 = vmatprep.subr.bf16.mxu0 0
      %368 = vmatpush1.bf16.msra.mxu0 0
      %369 = vmatprep.subr.bf16.mxu0 0
      %370 = vmatpush1.bf16.msra.mxu0 0
      %371 = vmatprep.subr.bf16.mxu0 0
      %372 = vmatpush1.bf16.msra.mxu0 0
      %373 = vmatprep.subr.bf16.mxu0 0
      %374 = vmatpush1.bf16.msra.mxu0 0
      %375 = vmatprep.subr.bf16.mxu0 0
      %376 = vmatpush1.bf16.msra.mxu0 0
      %377 = vmatprep.subr.bf16.mxu0 0
      %378 = vmatpush1.bf16.msra.mxu0 0
      %379 = vmatprep.subr.bf16.mxu0 0
      %380 = vmatpush1.bf16.msra.mxu0 0
      %381 = vmatprep.mubr.bf16.mxu0 0
      %382 = vmatmul.mubr.bf16.gmra.mrb[0].mxu0 %v248
      %v383 = vpop.f32.mrb[0].mxu0
      %v384 = vadd.f32 0.0, %v383
      %v385 = vpop.f32.mrb[0].mxu0
      %v386 = vpop.f32.mrb[0].mxu0
      %v387 = vadd.f32 0.0, %v386
      %v388 = vpop.f32.mrb[0].mxu0
      %389 = vdwg.mxu0
      %v406 = vunpack.c.l.b16 %v268
      %v407 = vunpack.c.l.b16 %v269
      %v408 = vunpack.c.l.b16 %v270
      %v409 = vunpack.c.l.b16 %v271
      %v410 = vunpack.c.l.b16 %v272
      %v411 = vunpack.c.l.b16 %v273
      %v412 = vunpack.c.l.b16 %v274
      %v413 = vunpack.c.l.b16 %v275
      %v414 = vunpack.c.l.b16 %v276
      %v415 = vunpack.c.l.b16 %v277
      %v416 = vunpack.c.l.b16 %v278
      %v417 = vunpack.c.l.b16 %v279
      %v418 = vunpack.c.l.b16 %v280
      %v419 = vunpack.c.l.b16 %v281
      %v420 = vunpack.c.l.b16 %v282
      %v421 = vunpack.c.l.b16 %v283
      %v422 = vpack.c.b16 %v407, %v406
      %v423 = vpack.c.b16 %v409, %v408
      %v424 = vpack.c.b16 %v411, %v410
      %v425 = vpack.c.b16 %v413, %v412
      %v426 = vpack.c.b16 %v415, %v414
      %v427 = vpack.c.b16 %v417, %v416
      %v428 = vpack.c.b16 %v419, %v418
      %v429 = vpack.c.b16 %v421, %v420
      %438 = vmatprep.subr.bf16.mxu0 0
      %439 = vmatpush1.bf16.msra.mxu0 %v422
      %440 = vmatprep.subr.bf16.mxu0 0
      %441 = vmatpush1.bf16.msra.mxu0 %v423
      %442 = vmatprep.subr.bf16.mxu0 0
      %443 = vmatpush1.bf16.msra.mxu0 %v424
      %444 = vmatprep.subr.bf16.mxu0 0
      %445 = vmatpush1.bf16.msra.mxu0 %v425
      %446 = vmatprep.subr.bf16.mxu0 0
      %447 = vmatpush1.bf16.msra.mxu0 %v426
      %448 = vmatprep.subr.bf16.mxu0 0
      %449 = vmatpush1.bf16.msra.mxu0 %v427
      %450 = vmatprep.subr.bf16.mxu0 0
      %451 = vmatpush1.bf16.msra.mxu0 %v428
      %452 = vmatprep.subr.bf16.mxu0 0
      %453 = vmatpush1.bf16.msra.mxu0 %v429
      %454 = vmatprep.subr.bf16.mxu0 0
      %455 = vmatpush1.bf16.msra.mxu0 0
      %456 = vmatprep.subr.bf16.mxu0 0
      %457 = vmatpush1.bf16.msra.mxu0 0
      %458 = vmatprep.subr.bf16.mxu0 0
      %459 = vmatpush1.bf16.msra.mxu0 0
      %460 = vmatprep.subr.bf16.mxu0 0
      %461 = vmatpush1.bf16.msra.mxu0 0
      %462 = vmatprep.subr.bf16.mxu0 0
      %463 = vmatpush1.bf16.msra.mxu0 0
      %464 = vmatprep.subr.bf16.mxu0 0
      %465 = vmatpush1.bf16.msra.mxu0 0
      %466 = vmatprep.subr.bf16.mxu0 0
      %467 = vmatpush1.bf16.msra.mxu0 0
      %468 = vmatprep.subr.bf16.mxu0 0
      %469 = vmatpush1.bf16.msra.mxu0 0
      %470 = vmatprep.mubr.bf16.mxu0 0
      %471 = vmatmul.mubr.bf16.gmra.mrb[0].mxu0 %v260
      %v472 = vpop.f32.mrb[0].mxu0
      %v473 = vadd.f32 %v384, %v472
      %v474 = vpop.f32.mrb[0].mxu0
      %v475 = vpop.f32.mrb[0].mxu0
      %v476 = vadd.f32 %v387, %v475
      %v477 = vpop.f32.mrb[0].mxu0
      %478 = vdwg.mxu0
      %s479 = scalar_lea.vmem %s1, 128
      %v480 = vld [vmem:[%s479] sm:$0xf]
      %v481 = vld [vmem:[%s479 + $0x4] sm:$0xf]
      %v482 = vld [vmem:[%s479 + $0x8] sm:$0xf]
      %v483 = vld [vmem:[%s479 + $0xc] sm:$0xf]
      %v484 = vld [vmem:[%s479 + $0x10] sm:$0xf]
      %v485 = vld [vmem:[%s479 + $0x14] sm:$0xf]
      %v486 = vld [vmem:[%s479 + $0x18] sm:$0xf]
      %v487 = vld [vmem:[%s479 + $0x1c] sm:$0xf]
      %v488 = vld [vmem:[%s479 + $0x20] sm:$0xf]
      %v489 = vld [vmem:[%s479 + $0x24] sm:$0xf]
      %v490 = vld [vmem:[%s479 + $0x28] sm:$0xf]
      %v491 = vld [vmem:[%s479 + $0x2c] sm:$0xf]
      %v492 = vld [vmem:[%s479 + $0x30] sm:$0xf]
      %v493 = vld [vmem:[%s479 + $0x34] sm:$0xf]
      %v494 = vld [vmem:[%s479 + $0x38] sm:$0xf]
      %v495 = vld [vmem:[%s479 + $0x3c] sm:$0xf]
      %v512 = vunpack.c.l.b16 %v480
      %v513 = vunpack.c.l.b16 %v481
      %v514 = vunpack.c.l.b16 %v482
      %v515 = vunpack.c.l.b16 %v483
      %v516 = vunpack.c.l.b16 %v484
      %v517 = vunpack.c.l.b16 %v485
      %v518 = vunpack.c.l.b16 %v486
      %v519 = vunpack.c.l.b16 %v487
      %v520 = vunpack.c.l.b16 %v488
      %v521 = vunpack.c.l.b16 %v489
      %v522 = vunpack.c.l.b16 %v490
      %v523 = vunpack.c.l.b16 %v491
      %v524 = vunpack.c.l.b16 %v492
      %v525 = vunpack.c.l.b16 %v493
      %v526 = vunpack.c.l.b16 %v494
      %v527 = vunpack.c.l.b16 %v495
      %v528 = vpack.c.b16 %v513, %v512
      %v529 = vpack.c.b16 %v515, %v514
      %v530 = vpack.c.b16 %v517, %v516
      %v531 = vpack.c.b16 %v519, %v518
      %v532 = vpack.c.b16 %v521, %v520
      %v533 = vpack.c.b16 %v523, %v522
      %v534 = vpack.c.b16 %v525, %v524
      %v535 = vpack.c.b16 %v527, %v526
      %544 = vmatprep.subr.bf16.mxu0 0
      %545 = vmatpush1.bf16.msra.mxu0 %v528
      %546 = vmatprep.subr.bf16.mxu0 0
      %547 = vmatpush1.bf16.msra.mxu0 %v529
      %548 = vmatprep.subr.bf16.mxu0 0
      %549 = vmatpush1.bf16.msra.mxu0 %v530
      %550 = vmatprep.subr.bf16.mxu0 0
      %551 = vmatpush1.bf16.msra.mxu0 %v531
      %552 = vmatprep.subr.bf16.mxu0 0
      %553 = vmatpush1.bf16.msra.mxu0 %v532
      %554 = vmatprep.subr.bf16.mxu0 0
      %555 = vmatpush1.bf16.msra.mxu0 %v533
      %556 = vmatprep.subr.bf16.mxu0 0
      %557 = vmatpush1.bf16.msra.mxu0 %v534
      %558 = vmatprep.subr.bf16.mxu0 0
      %559 = vmatpush1.bf16.msra.mxu0 %v535
      %560 = vmatprep.subr.bf16.mxu0 0
      %561 = vmatpush1.bf16.msra.mxu0 0
      %562 = vmatprep.subr.bf16.mxu0 0
      %563 = vmatpush1.bf16.msra.mxu0 0
      %564 = vmatprep.subr.bf16.mxu0 0
      %565 = vmatpush1.bf16.msra.mxu0 0
      %566 = vmatprep.subr.bf16.mxu0 0
      %567 = vmatpush1.bf16.msra.mxu0 0
      %568 = vmatprep.subr.bf16.mxu0 0
      %569 = vmatpush1.bf16.msra.mxu0 0
      %570 = vmatprep.subr.bf16.mxu0 0
      %571 = vmatpush1.bf16.msra.mxu0 0
      %572 = vmatprep.subr.bf16.mxu0 0
      %573 = vmatpush1.bf16.msra.mxu0 0
      %574 = vmatprep.subr.bf16.mxu0 0
      %575 = vmatpush1.bf16.msra.mxu0 0
      %576 = vmatprep.mubr.bf16.mxu0 0
      %577 = vmatmul.mubr.bf16.gmra.mrb[0].mxu0 %v267
      %v578 = vpop.f32.mrb[0].mxu0
      %v579 = vadd.f32 0.0, %v578
      %v580 = vpop.f32.mrb[0].mxu0
      %v581 = vpop.f32.mrb[0].mxu0
      %v582 = vadd.f32 0.0, %v581
      %v583 = vpop.f32.mrb[0].mxu0
      %584 = vdwg.mxu0
      %v585 = vadd.f32 %v473, %v579
      %v586 = vadd.f32 %v476, %v582
      %v587 = vld [vmem:[%s4] sm:$0x1]
      %v589 = vlaneseq
      %v590 = vshrl.u32 %v589, 7
      %v591 = vsub.s32 0, %v590
      %v592 = vrot.slane %v587, %v591
      %v594 = vadd.f32 %v585, %v592
      %v595 = vadd.f32 %v586, %v592
      %s596 = scalar_lea.vmem %s2, 1
      %v597 = vld [vmem:[%s596] sm:$0x1]
      %v599 = vlaneseq
      %v600 = vshrl.u32 %v599, 7
      %v601 = vsub.s32 0, %v600
      %v602 = vrot.slane %v597, %v601
      %v604 = vmul.f32 %v594, %v602
      %v605 = vmul.f32 %v595, %v602
      %s606 = scalar_lea.vmem %s3, 1
      %v607 = vld [vmem:[%s606] sm:$0x1]
      %v609 = vlaneseq
      %v610 = vshrl.u32 %v609, 7
      %v611 = vsub.s32 0, %v610
      %v612 = vrot.slane %v607, %v611
      %v614 = vadd.f32 %v604, %v612
      %v615 = vadd.f32 %v605, %v612
      %v616 = vmax.f32 %v614, 0.0
      %v617 = vmax.f32 %v615, 0.0
      %v618 = vpack.c.bf16 %v617, %v616
      %v620 = vshrl.u32 %v618, 16
      %v622 = vrot.slane %v620, 7
      %v623 = vshll.u32 %v618, 16
      %v625 = vor.u32 %v622, %v623
      %v627 = vsel %vm259, 0, %v625
      %v628 = vrot.slane %v623, 1
      %v629 = vor.u32 %v620, %v628
      %v631 = vsel %vm266, %v629, 0
      %s632 = scalar_lea.vmem %s1, 192
      %v633 = vld [vmem:[%s632] sm:$0xf]
      %v634 = vld [vmem:[%s632 + $0x4] sm:$0xf]
      %v635 = vld [vmem:[%s632 + $0x8] sm:$0xf]
      %v636 = vld [vmem:[%s632 + $0xc] sm:$0xf]
      %v637 = vld [vmem:[%s632 + $0x10] sm:$0xf]
      %v638 = vld [vmem:[%s632 + $0x14] sm:$0xf]
      %v639 = vld [vmem:[%s632 + $0x18] sm:$0xf]
      %v640 = vld [vmem:[%s632 + $0x1c] sm:$0xf]
      %v641 = vld [vmem:[%s632 + $0x20] sm:$0xf]
      %v642 = vld [vmem:[%s632 + $0x24] sm:$0xf]
      %v643 = vld [vmem:[%s632 + $0x28] sm:$0xf]
      %v644 = vld [vmem:[%s632 + $0x2c] sm:$0xf]
      %v645 = vld [vmem:[%s632 + $0x30] sm:$0xf]
      %v646 = vld [vmem:[%s632 + $0x34] sm:$0xf]
      %v647 = vld [vmem:[%s632 + $0x38] sm:$0xf]
      %v648 = vld [vmem:[%s632 + $0x3c] sm:$0xf]
      %s649 = scalar_lea.vmem %s1, 256
      %v650 = vld [vmem:[%s649] sm:$0xf]
      %v651 = vld [vmem:[%s649 + $0x4] sm:$0xf]
      %v652 = vld [vmem:[%s649 + $0x8] sm:$0xf]
      %v653 = vld [vmem:[%s649 + $0xc] sm:$0xf]
      %v654 = vld [vmem:[%s649 + $0x10] sm:$0xf]
      %v655 = vld [vmem:[%s649 + $0x14] sm:$0xf]
      %v656 = vld [vmem:[%s649 + $0x18] sm:$0xf]
      %v657 = vld [vmem:[%s649 + $0x1c] sm:$0xf]
      %v658 = vld [vmem:[%s649 + $0x20] sm:$0xf]
      %v659 = vld [vmem:[%s649 + $0x24] sm:$0xf]
      %v660 = vld [vmem:[%s649 + $0x28] sm:$0xf]
      %v661 = vld [vmem:[%s649 + $0x2c] sm:$0xf]
      %v662 = vld [vmem:[%s649 + $0x30] sm:$0xf]
      %v663 = vld [vmem:[%s649 + $0x34] sm:$0xf]
      %v664 = vld [vmem:[%s649 + $0x38] sm:$0xf]
      %v665 = vld [vmem:[%s649 + $0x3c] sm:$0xf]
      %v682 = vunpack.c.l.b16 %v650
      %v683 = vunpack.c.l.b16 %v651
      %v684 = vunpack.c.l.b16 %v652
      %v685 = vunpack.c.l.b16 %v653
      %v686 = vunpack.c.l.b16 %v654
      %v687 = vunpack.c.l.b16 %v655
      %v688 = vunpack.c.l.b16 %v656
      %v689 = vunpack.c.l.b16 %v657
      %v690 = vunpack.c.l.b16 %v658
      %v691 = vunpack.c.l.b16 %v659
      %v692 = vunpack.c.l.b16 %v660
      %v693 = vunpack.c.l.b16 %v661
      %v694 = vunpack.c.l.b16 %v662
      %v695 = vunpack.c.l.b16 %v663
      %v696 = vunpack.c.l.b16 %v664
      %v697 = vunpack.c.l.b16 %v665
      %v698 = vpack.c.b16 %v683, %v682
      %v699 = vpack.c.b16 %v685, %v684
      %v700 = vpack.c.b16 %v687, %v686
      %v701 = vpack.c.b16 %v689, %v688
      %v702 = vpack.c.b16 %v691, %v690
      %v703 = vpack.c.b16 %v693, %v692
      %v704 = vpack.c.b16 %v695, %v694
      %v705 = vpack.c.b16 %v697, %v696
      %714 = vmatprep.subr.bf16.mxu0 0
      %715 = vmatpush1.bf16.msra.mxu0 %v698
      %716 = vmatprep.subr.bf16.mxu0 0
      %717 = vmatpush1.bf16.msra.mxu0 %v699
      %718 = vmatprep.subr.bf16.mxu0 0
      %719 = vmatpush1.bf16.msra.mxu0 %v700
      %720 = vmatprep.subr.bf16.mxu0 0
      %721 = vmatpush1.bf16.msra.mxu0 %v701
      %722 = vmatprep.subr.bf16.mxu0 0
      %723 = vmatpush1.bf16.msra.mxu0 %v702
      %724 = vmatprep.subr.bf16.mxu0 0
      %725 = vmatpush1.bf16.msra.mxu0 %v703
      %726 = vmatprep.subr.bf16.mxu0 0
      %727 = vmatpush1.bf16.msra.mxu0 %v704
      %728 = vmatprep.subr.bf16.mxu0 0
      %729 = vmatpush1.bf16.msra.mxu0 %v705
      %730 = vmatprep.subr.bf16.mxu0 0
      %731 = vmatpush1.bf16.msra.mxu0 0
      %732 = vmatprep.subr.bf16.mxu0 0
      %733 = vmatpush1.bf16.msra.mxu0 0
      %734 = vmatprep.subr.bf16.mxu0 0
      %735 = vmatpush1.bf16.msra.mxu0 0
      %736 = vmatprep.subr.bf16.mxu0 0
      %737 = vmatpush1.bf16.msra.mxu0 0
      %738 = vmatprep.subr.bf16.mxu0 0
      %739 = vmatpush1.bf16.msra.mxu0 0
      %740 = vmatprep.subr.bf16.mxu0 0
      %741 = vmatpush1.bf16.msra.mxu0 0
      %742 = vmatprep.subr.bf16.mxu0 0
      %743 = vmatpush1.bf16.msra.mxu0 0
      %744 = vmatprep.subr.bf16.mxu0 0
      %745 = vmatpush1.bf16.msra.mxu0 0
      %746 = vmatprep.mubr.bf16.mxu0 0
      %747 = vmatmul.mubr.bf16.gmra.mrb[0].mxu0 %v618
      %v748 = vpop.f32.mrb[0].mxu0
      %v749 = vadd.f32 0.0, %v748
      %v750 = vpop.f32.mrb[0].mxu0
      %v751 = vpop.f32.mrb[0].mxu0
      %v752 = vadd.f32 0.0, %v751
      %v753 = vpop.f32.mrb[0].mxu0
      %754 = vdwg.mxu0
      %v771 = vunpack.c.l.b16 %v633
      %v772 = vunpack.c.l.b16 %v634
      %v773 = vunpack.c.l.b16 %v635
      %v774 = vunpack.c.l.b16 %v636
      %v775 = vunpack.c.l.b16 %v637
      %v776 = vunpack.c.l.b16 %v638
      %v777 = vunpack.c.l.b16 %v639
      %v778 = vunpack.c.l.b16 %v640
      %v779 = vunpack.c.l.b16 %v641
      %v780 = vunpack.c.l.b16 %v642
      %v781 = vunpack.c.l.b16 %v643
      %v782 = vunpack.c.l.b16 %v644
      %v783 = vunpack.c.l.b16 %v645
      %v784 = vunpack.c.l.b16 %v646
      %v785 = vunpack.c.l.b16 %v647
      %v786 = vunpack.c.l.b16 %v648
      %v787 = vpack.c.b16 %v772, %v771
      %v788 = vpack.c.b16 %v774, %v773
      %v789 = vpack.c.b16 %v776, %v775
      %v790 = vpack.c.b16 %v778, %v777
      %v791 = vpack.c.b16 %v780, %v779
      %v792 = vpack.c.b16 %v782, %v781
      %v793 = vpack.c.b16 %v784, %v783
      %v794 = vpack.c.b16 %v786, %v785
      %803 = vmatprep.subr.bf16.mxu0 0
      %804 = vmatpush1.bf16.msra.mxu0 %v787
      %805 = vmatprep.subr.bf16.mxu0 0
      %806 = vmatpush1.bf16.msra.mxu0 %v788
      %807 = vmatprep.subr.bf16.mxu0 0
      %808 = vmatpush1.bf16.msra.mxu0 %v789
      %809 = vmatprep.subr.bf16.mxu0 0
      %810 = vmatpush1.bf16.msra.mxu0 %v790
      %811 = vmatprep.subr.bf16.mxu0 0
      %812 = vmatpush1.bf16.msra.mxu0 %v791
      %813 = vmatprep.subr.bf16.mxu0 0
      %814 = vmatpush1.bf16.msra.mxu0 %v792
      %815 = vmatprep.subr.bf16.mxu0 0
      %816 = vmatpush1.bf16.msra.mxu0 %v793
      %817 = vmatprep.subr.bf16.mxu0 0
      %818 = vmatpush1.bf16.msra.mxu0 %v794
      %819 = vmatprep.subr.bf16.mxu0 0
      %820 = vmatpush1.bf16.msra.mxu0 0
      %821 = vmatprep.subr.bf16.mxu0 0
      %822 = vmatpush1.bf16.msra.mxu0 0
      %823 = vmatprep.subr.bf16.mxu0 0
      %824 = vmatpush1.bf16.msra.mxu0 0
      %825 = vmatprep.subr.bf16.mxu0 0
      %826 = vmatpush1.bf16.msra.mxu0 0
      %827 = vmatprep.subr.bf16.mxu0 0
      %828 = vmatpush1.bf16.msra.mxu0 0
      %829 = vmatprep.subr.bf16.mxu0 0
      %830 = vmatpush1.bf16.msra.mxu0 0
      %831 = vmatprep.subr.bf16.mxu0 0
      %832 = vmatpush1.bf16.msra.mxu0 0
      %833 = vmatprep.subr.bf16.mxu0 0
      %834 = vmatpush1.bf16.msra.mxu0 0
      %835 = vmatprep.mubr.bf16.mxu0 0
      %836 = vmatmul.mubr.bf16.gmra.mrb[0].mxu0 %v627
      %v837 = vpop.f32.mrb[0].mxu0
      %v838 = vadd.f32 %v749, %v837
      %v839 = vpop.f32.mrb[0].mxu0
      %v840 = vpop.f32.mrb[0].mxu0
      %v841 = vadd.f32 %v752, %v840
      %v842 = vpop.f32.mrb[0].mxu0
      %843 = vdwg.mxu0
      %s844 = scalar_lea.vmem %s1, 320
      %v845 = vld [vmem:[%s844] sm:$0xf]
      %v846 = vld [vmem:[%s844 + $0x4] sm:$0xf]
      %v847 = vld [vmem:[%s844 + $0x8] sm:$0xf]
      %v848 = vld [vmem:[%s844 + $0xc] sm:$0xf]
      %v849 = vld [vmem:[%s844 + $0x10] sm:$0xf]
      %v850 = vld [vmem:[%s844 + $0x14] sm:$0xf]
      %v851 = vld [vmem:[%s844 + $0x18] sm:$0xf]
      %v852 = vld [vmem:[%s844 + $0x1c] sm:$0xf]
      %v853 = vld [vmem:[%s844 + $0x20] sm:$0xf]
      %v854 = vld [vmem:[%s844 + $0x24] sm:$0xf]
      %v855 = vld [vmem:[%s844 + $0x28] sm:$0xf]
      %v856 = vld [vmem:[%s844 + $0x2c] sm:$0xf]
      %v857 = vld [vmem:[%s844 + $0x30] sm:$0xf]
      %v858 = vld [vmem:[%s844 + $0x34] sm:$0xf]
      %v859 = vld [vmem:[%s844 + $0x38] sm:$0xf]
      %v860 = vld [vmem:[%s844 + $0x3c] sm:$0xf]
      %v877 = vunpack.c.l.b16 %v845
      %v878 = vunpack.c.l.b16 %v846
      %v879 = vunpack.c.l.b16 %v847
      %v880 = vunpack.c.l.b16 %v848
      %v881 = vunpack.c.l.b16 %v849
      %v882 = vunpack.c.l.b16 %v850
      %v883 = vunpack.c.l.b16 %v851
      %v884 = vunpack.c.l.b16 %v852
      %v885 = vunpack.c.l.b16 %v853
      %v886 = vunpack.c.l.b16 %v854
      %v887 = vunpack.c.l.b16 %v855
      %v888 = vunpack.c.l.b16 %v856
      %v889 = vunpack.c.l.b16 %v857
      %v890 = vunpack.c.l.b16 %v858
      %v891 = vunpack.c.l.b16 %v859
      %v892 = vunpack.c.l.b16 %v860
      %v893 = vpack.c.b16 %v878, %v877
      %v894 = vpack.c.b16 %v880, %v879
      %v895 = vpack.c.b16 %v882, %v881
      %v896 = vpack.c.b16 %v884, %v883
      %v897 = vpack.c.b16 %v886, %v885
      %v898 = vpack.c.b16 %v888, %v887
      %v899 = vpack.c.b16 %v890, %v889
      %v900 = vpack.c.b16 %v892, %v891
      %909 = vmatprep.subr.bf16.mxu0 0
      %910 = vmatpush1.bf16.msra.mxu0 %v893
      %911 = vmatprep.subr.bf16.mxu0 0
      %912 = vmatpush1.bf16.msra.mxu0 %v894
      %913 = vmatprep.subr.bf16.mxu0 0
      %914 = vmatpush1.bf16.msra.mxu0 %v895
      %915 = vmatprep.subr.bf16.mxu0 0
      %916 = vmatpush1.bf16.msra.mxu0 %v896
      %917 = vmatprep.subr.bf16.mxu0 0
      %918 = vmatpush1.bf16.msra.mxu0 %v897
      %919 = vmatprep.subr.bf16.mxu0 0
      %920 = vmatpush1.bf16.msra.mxu0 %v898
      %921 = vmatprep.subr.bf16.mxu0 0
      %922 = vmatpush1.bf16.msra.mxu0 %v899
      %923 = vmatprep.subr.bf16.mxu0 0
      %924 = vmatpush1.bf16.msra.mxu0 %v900
      %925 = vmatprep.subr.bf16.mxu0 0
      %926 = vmatpush1.bf16.msra.mxu0 0
      %927 = vmatprep.subr.bf16.mxu0 0
      %928 = vmatpush1.bf16.msra.mxu0 0
      %929 = vmatprep.subr.bf16.mxu0 0
      %930 = vmatpush1.bf16.msra.mxu0 0
      %931 = vmatprep.subr.bf16.mxu0 0
      %932 = vmatpush1.bf16.msra.mxu0 0
      %933 = vmatprep.subr.bf16.mxu0 0
      %934 = vmatpush1.bf16.msra.mxu0 0
      %935 = vmatprep.subr.bf16.mxu0 0
      %936 = vmatpush1.bf16.msra.mxu0 0
      %937 = vmatprep.subr.bf16.mxu0 0
      %938 = vmatpush1.bf16.msra.mxu0 0
      %939 = vmatprep.subr.bf16.mxu0 0
      %940 = vmatpush1.bf16.msra.mxu0 0
      %941 = vmatprep.mubr.bf16.mxu0 0
      %942 = vmatmul.mubr.bf16.gmra.mrb[0].mxu0 %v631
      %v943 = vpop.f32.mrb[0].mxu0
      %v944 = vadd.f32 0.0, %v943
      %v945 = vpop.f32.mrb[0].mxu0
      %v946 = vpop.f32.mrb[0].mxu0
      %v947 = vadd.f32 0.0, %v946
      %v948 = vpop.f32.mrb[0].mxu0
      %949 = vdwg.mxu0
      %v950 = vadd.f32 %v838, %v944
      %v951 = vadd.f32 %v841, %v947
      %s952 = scalar_lea.vmem %s4, 1
      %v953 = vld [vmem:[%s952] sm:$0x1]
      %v955 = vlaneseq
      %v956 = vshrl.u32 %v955, 7
      %v957 = vsub.s32 0, %v956
      %v958 = vrot.slane %v953, %v957
      %v960 = vadd.f32 %v950, %v958
      %v961 = vadd.f32 %v951, %v958
      %v962 = vadd.f32 %v960, %v226
      %v963 = vadd.f32 %v961, %v227
      %s964 = scalar_lea.vmem %s2, 2
      %v965 = vld [vmem:[%s964] sm:$0x1]
      %v967 = vlaneseq
      %v968 = vshrl.u32 %v967, 7
      %v969 = vsub.s32 0, %v968
      %v970 = vrot.slane %v965, %v969
      %v972 = vmul.f32 %v962, %v970
      %v973 = vmul.f32 %v963, %v970
      %s974 = scalar_lea.vmem %s3, 2
      %v975 = vld [vmem:[%s974] sm:$0x1]
      %v977 = vlaneseq
      %v978 = vshrl.u32 %v977, 7
      %v979 = vsub.s32 0, %v978
      %v980 = vrot.slane %v975, %v979
      %v982 = vadd.f32 %v972, %v980
      %v983 = vadd.f32 %v973, %v980
      %v984 = vmax.f32 %v982, 0.0
      %v985 = vmax.f32 %v983, 0.0
      %v986 = vpack.c.bf16 %v985, %v984
      %v988 = vshrl.u32 %v986, 16
      %v990 = vrot.slane %v988, 7
      %v991 = vshll.u32 %v986, 16
      %v993 = vor.u32 %v990, %v991
      %v995 = vsel %vm259, 0, %v993
      %v996 = vrot.slane %v991, 1
      %v997 = vor.u32 %v988, %v996
      %v999 = vsel %vm266, %v997, 0
      %s1000 = scalar_lea.vmem %s1, 384
      %v1001 = vld [vmem:[%s1000] sm:$0xf]
      %v1002 = vld [vmem:[%s1000 + $0x4] sm:$0xf]
      %v1003 = vld [vmem:[%s1000 + $0x8] sm:$0xf]
      %v1004 = vld [vmem:[%s1000 + $0xc] sm:$0xf]
      %v1005 = vld [vmem:[%s1000 + $0x10] sm:$0xf]
      %v1006 = vld [vmem:[%s1000 + $0x14] sm:$0xf]
      %v1007 = vld [vmem:[%s1000 + $0x18] sm:$0xf]
      %v1008 = vld [vmem:[%s1000 + $0x1c] sm:$0xf]
      %v1009 = vld [vmem:[%s1000 + $0x20] sm:$0xf]
      %v1010 = vld [vmem:[%s1000 + $0x24] sm:$0xf]
      %v1011 = vld [vmem:[%s1000 + $0x28] sm:$0xf]
      %v1012 = vld [vmem:[%s1000 + $0x2c] sm:$0xf]
      %v1013 = vld [vmem:[%s1000 + $0x30] sm:$0xf]
      %v1014 = vld [vmem:[%s1000 + $0x34] sm:$0xf]
      %v1015 = vld [vmem:[%s1000 + $0x38] sm:$0xf]
      %v1016 = vld [vmem:[%s1000 + $0x3c] sm:$0xf]
      %s1017 = scalar_lea.vmem %s1, 448
      %v1018 = vld [vmem:[%s1017] sm:$0xf]
      %v1019 = vld [vmem:[%s1017 + $0x4] sm:$0xf]
      %v1020 = vld [vmem:[%s1017 + $0x8] sm:$0xf]
      %v1021 = vld [vmem:[%s1017 + $0xc] sm:$0xf]
      %v1022 = vld [vmem:[%s1017 + $0x10] sm:$0xf]
      %v1023 = vld [vmem:[%s1017 + $0x14] sm:$0xf]
      %v1024 = vld [vmem:[%s1017 + $0x18] sm:$0xf]
      %v1025 = vld [vmem:[%s1017 + $0x1c] sm:$0xf]
      %v1026 = vld [vmem:[%s1017 + $0x20] sm:$0xf]
      %v1027 = vld [vmem:[%s1017 + $0x24] sm:$0xf]
      %v1028 = vld [vmem:[%s1017 + $0x28] sm:$0xf]
      %v1029 = vld [vmem:[%s1017 + $0x2c] sm:$0xf]
      %v1030 = vld [vmem:[%s1017 + $0x30] sm:$0xf]
      %v1031 = vld [vmem:[%s1017 + $0x34] sm:$0xf]
      %v1032 = vld [vmem:[%s1017 + $0x38] sm:$0xf]
      %v1033 = vld [vmem:[%s1017 + $0x3c] sm:$0xf]
      %v1050 = vunpack.c.l.b16 %v1018
      %v1051 = vunpack.c.l.b16 %v1019
      %v1052 = vunpack.c.l.b16 %v1020
      %v1053 = vunpack.c.l.b16 %v1021
      %v1054 = vunpack.c.l.b16 %v1022
      %v1055 = vunpack.c.l.b16 %v1023
      %v1056 = vunpack.c.l.b16 %v1024
      %v1057 = vunpack.c.l.b16 %v1025
      %v1058 = vunpack.c.l.b16 %v1026
      %v1059 = vunpack.c.l.b16 %v1027
      %v1060 = vunpack.c.l.b16 %v1028
      %v1061 = vunpack.c.l.b16 %v1029
      %v1062 = vunpack.c.l.b16 %v1030
      %v1063 = vunpack.c.l.b16 %v1031
      %v1064 = vunpack.c.l.b16 %v1032
      %v1065 = vunpack.c.l.b16 %v1033
      %v1066 = vpack.c.b16 %v1051, %v1050
      %v1067 = vpack.c.b16 %v1053, %v1052
      %v1068 = vpack.c.b16 %v1055, %v1054
      %v1069 = vpack.c.b16 %v1057, %v1056
      %v1070 = vpack.c.b16 %v1059, %v1058
      %v1071 = vpack.c.b16 %v1061, %v1060
      %v1072 = vpack.c.b16 %v1063, %v1062
      %v1073 = vpack.c.b16 %v1065, %v1064
      %1082 = vmatprep.subr.bf16.mxu0 0
      %1083 = vmatpush1.bf16.msra.mxu0 %v1066
      %1084 = vmatprep.subr.bf16.mxu0 0
      %1085 = vmatpush1.bf16.msra.mxu0 %v1067
      %1086 = vmatprep.subr.bf16.mxu0 0
      %1087 = vmatpush1.bf16.msra.mxu0 %v1068
      %1088 = vmatprep.subr.bf16.mxu0 0
      %1089 = vmatpush1.bf16.msra.mxu0 %v1069
      %1090 = vmatprep.subr.bf16.mxu0 0
      %1091 = vmatpush1.bf16.msra.mxu0 %v1070
      %1092 = vmatprep.subr.bf16.mxu0 0
      %1093 = vmatpush1.bf16.msra.mxu0 %v1071
      %1094 = vmatprep.subr.bf16.mxu0 0
      %1095 = vmatpush1.bf16.msra.mxu0 %v1072
      %1096 = vmatprep.subr.bf16.mxu0 0
      %1097 = vmatpush1.bf16.msra.mxu0 %v1073
      %1098 = vmatprep.subr.bf16.mxu0 0
      %1099 = vmatpush1.bf16.msra.mxu0 0
      %1100 = vmatprep.subr.bf16.mxu0 0
      %1101 = vmatpush1.bf16.msra.mxu0 0
      %1102 = vmatprep.subr.bf16.mxu0 0
      %1103 = vmatpush1.bf16.msra.mxu0 0
      %1104 = vmatprep.subr.bf16.mxu0 0
      %1105 = vmatpush1.bf16.msra.mxu0 0
      %1106 = vmatprep.subr.bf16.mxu0 0
      %1107 = vmatpush1.bf16.msra.mxu0 0
      %1108 = vmatprep.subr.bf16.mxu0 0
      %1109 = vmatpush1.bf16.msra.mxu0 0
      %1110 = vmatprep.subr.bf16.mxu0 0
      %1111 = vmatpush1.bf16.msra.mxu0 0
      %1112 = vmatprep.subr.bf16.mxu0 0
      %1113 = vmatpush1.bf16.msra.mxu0 0
      %1114 = vmatprep.mubr.bf16.mxu0 0
      %1115 = vmatmul.mubr.bf16.gmra.mrb[0].mxu0 %v986
      %v1116 = vpop.f32.mrb[0].mxu0
      %v1117 = vadd.f32 0.0, %v1116
      %v1118 = vpop.f32.mrb[0].mxu0
      %v1119 = vpop.f32.mrb[0].mxu0
      %v1120 = vadd.f32 0.0, %v1119
      %v1121 = vpop.f32.mrb[0].mxu0
      %1122 = vdwg.mxu0
      %v1139 = vunpack.c.l.b16 %v1001
      %v1140 = vunpack.c.l.b16 %v1002
      %v1141 = vunpack.c.l.b16 %v1003
      %v1142 = vunpack.c.l.b16 %v1004
      %v1143 = vunpack.c.l.b16 %v1005
      %v1144 = vunpack.c.l.b16 %v1006
      %v1145 = vunpack.c.l.b16 %v1007
      %v1146 = vunpack.c.l.b16 %v1008
      %v1147 = vunpack.c.l.b16 %v1009
      %v1148 = vunpack.c.l.b16 %v1010
      %v1149 = vunpack.c.l.b16 %v1011
      %v1150 = vunpack.c.l.b16 %v1012
      %v1151 = vunpack.c.l.b16 %v1013
      %v1152 = vunpack.c.l.b16 %v1014
      %v1153 = vunpack.c.l.b16 %v1015
      %v1154 = vunpack.c.l.b16 %v1016
      %v1155 = vpack.c.b16 %v1140, %v1139
      %v1156 = vpack.c.b16 %v1142, %v1141
      %v1157 = vpack.c.b16 %v1144, %v1143
      %v1158 = vpack.c.b16 %v1146, %v1145
      %v1159 = vpack.c.b16 %v1148, %v1147
      %v1160 = vpack.c.b16 %v1150, %v1149
      %v1161 = vpack.c.b16 %v1152, %v1151
      %v1162 = vpack.c.b16 %v1154, %v1153
      %1171 = vmatprep.subr.bf16.mxu0 0
      %1172 = vmatpush1.bf16.msra.mxu0 %v1155
      %1173 = vmatprep.subr.bf16.mxu0 0
      %1174 = vmatpush1.bf16.msra.mxu0 %v1156
      %1175 = vmatprep.subr.bf16.mxu0 0
      %1176 = vmatpush1.bf16.msra.mxu0 %v1157
      %1177 = vmatprep.subr.bf16.mxu0 0
      %1178 = vmatpush1.bf16.msra.mxu0 %v1158
      %1179 = vmatprep.subr.bf16.mxu0 0
      %1180 = vmatpush1.bf16.msra.mxu0 %v1159
      %1181 = vmatprep.subr.bf16.mxu0 0
      %1182 = vmatpush1.bf16.msra.mxu0 %v1160
      %1183 = vmatprep.subr.bf16.mxu0 0
      %1184 = vmatpush1.bf16.msra.mxu0 %v1161
      %1185 = vmatprep.subr.bf16.mxu0 0
      %1186 = vmatpush1.bf16.msra.mxu0 %v1162
      %1187 = vmatprep.subr.bf16.mxu0 0
      %1188 = vmatpush1.bf16.msra.mxu0 0
      %1189 = vmatprep.subr.bf16.mxu0 0
      %1190 = vmatpush1.bf16.msra.mxu0 0
      %1191 = vmatprep.subr.bf16.mxu0 0
      %1192 = vmatpush1.bf16.msra.mxu0 0
      %1193 = vmatprep.subr.bf16.mxu0 0
      %1194 = vmatpush1.bf16.msra.mxu0 0
      %1195 = vmatprep.subr.bf16.mxu0 0
      %1196 = vmatpush1.bf16.msra.mxu0 0
      %1197 = vmatprep.subr.bf16.mxu0 0
      %1198 = vmatpush1.bf16.msra.mxu0 0
      %1199 = vmatprep.subr.bf16.mxu0 0
      %1200 = vmatpush1.bf16.msra.mxu0 0
      %1201 = vmatprep.subr.bf16.mxu0 0
      %1202 = vmatpush1.bf16.msra.mxu0 0
      %1203 = vmatprep.mubr.bf16.mxu0 0
      %1204 = vmatmul.mubr.bf16.gmra.mrb[0].mxu0 %v995
      %v1205 = vpop.f32.mrb[0].mxu0
      %v1206 = vadd.f32 %v1117, %v1205
      %v1207 = vpop.f32.mrb[0].mxu0
      %v1208 = vpop.f32.mrb[0].mxu0
      %v1209 = vadd.f32 %v1120, %v1208
      %v1210 = vpop.f32.mrb[0].mxu0
      %1211 = vdwg.mxu0
      %s1212 = scalar_lea.vmem %s1, 512
      %v1213 = vld [vmem:[%s1212] sm:$0xf]
      %v1214 = vld [vmem:[%s1212 + $0x4] sm:$0xf]
      %v1215 = vld [vmem:[%s1212 + $0x8] sm:$0xf]
      %v1216 = vld [vmem:[%s1212 + $0xc] sm:$0xf]
      %v1217 = vld [vmem:[%s1212 + $0x10] sm:$0xf]
      %v1218 = vld [vmem:[%s1212 + $0x14] sm:$0xf]
      %v1219 = vld [vmem:[%s1212 + $0x18] sm:$0xf]
      %v1220 = vld [vmem:[%s1212 + $0x1c] sm:$0xf]
      %v1221 = vld [vmem:[%s1212 + $0x20] sm:$0xf]
      %v1222 = vld [vmem:[%s1212 + $0x24] sm:$0xf]
      %v1223 = vld [vmem:[%s1212 + $0x28] sm:$0xf]
      %v1224 = vld [vmem:[%s1212 + $0x2c] sm:$0xf]
      %v1225 = vld [vmem:[%s1212 + $0x30] sm:$0xf]
      %v1226 = vld [vmem:[%s1212 + $0x34] sm:$0xf]
      %v1227 = vld [vmem:[%s1212 + $0x38] sm:$0xf]
      %v1228 = vld [vmem:[%s1212 + $0x3c] sm:$0xf]
      %v1245 = vunpack.c.l.b16 %v1213
      %v1246 = vunpack.c.l.b16 %v1214
      %v1247 = vunpack.c.l.b16 %v1215
      %v1248 = vunpack.c.l.b16 %v1216
      %v1249 = vunpack.c.l.b16 %v1217
      %v1250 = vunpack.c.l.b16 %v1218
      %v1251 = vunpack.c.l.b16 %v1219
      %v1252 = vunpack.c.l.b16 %v1220
      %v1253 = vunpack.c.l.b16 %v1221
      %v1254 = vunpack.c.l.b16 %v1222
      %v1255 = vunpack.c.l.b16 %v1223
      %v1256 = vunpack.c.l.b16 %v1224
      %v1257 = vunpack.c.l.b16 %v1225
      %v1258 = vunpack.c.l.b16 %v1226
      %v1259 = vunpack.c.l.b16 %v1227
      %v1260 = vunpack.c.l.b16 %v1228
      %v1261 = vpack.c.b16 %v1246, %v1245
      %v1262 = vpack.c.b16 %v1248, %v1247
      %v1263 = vpack.c.b16 %v1250, %v1249
      %v1264 = vpack.c.b16 %v1252, %v1251
      %v1265 = vpack.c.b16 %v1254, %v1253
      %v1266 = vpack.c.b16 %v1256, %v1255
      %v1267 = vpack.c.b16 %v1258, %v1257
      %v1268 = vpack.c.b16 %v1260, %v1259
      %1277 = vmatprep.subr.bf16.mxu0 0
      %1278 = vmatpush1.bf16.msra.mxu0 %v1261
      %1279 = vmatprep.subr.bf16.mxu0 0
      %1280 = vmatpush1.bf16.msra.mxu0 %v1262
      %1281 = vmatprep.subr.bf16.mxu0 0
      %1282 = vmatpush1.bf16.msra.mxu0 %v1263
      %1283 = vmatprep.subr.bf16.mxu0 0
      %1284 = vmatpush1.bf16.msra.mxu0 %v1264
      %1285 = vmatprep.subr.bf16.mxu0 0
      %1286 = vmatpush1.bf16.msra.mxu0 %v1265
      %1287 = vmatprep.subr.bf16.mxu0 0
      %1288 = vmatpush1.bf16.msra.mxu0 %v1266
      %1289 = vmatprep.subr.bf16.mxu0 0
      %1290 = vmatpush1.bf16.msra.mxu0 %v1267
      %1291 = vmatprep.subr.bf16.mxu0 0
      %1292 = vmatpush1.bf16.msra.mxu0 %v1268
      %1293 = vmatprep.subr.bf16.mxu0 0
      %1294 = vmatpush1.bf16.msra.mxu0 0
      %1295 = vmatprep.subr.bf16.mxu0 0
      %1296 = vmatpush1.bf16.msra.mxu0 0
      %1297 = vmatprep.subr.bf16.mxu0 0
      %1298 = vmatpush1.bf16.msra.mxu0 0
      %1299 = vmatprep.subr.bf16.mxu0 0
      %1300 = vmatpush1.bf16.msra.mxu0 0
      %1301 = vmatprep.subr.bf16.mxu0 0
      %1302 = vmatpush1.bf16.msra.mxu0 0
      %1303 = vmatprep.subr.bf16.mxu0 0
      %1304 = vmatpush1.bf16.msra.mxu0 0
      %1305 = vmatprep.subr.bf16.mxu0 0
      %1306 = vmatpush1.bf16.msra.mxu0 0
      %1307 = vmatprep.subr.bf16.mxu0 0
      %1308 = vmatpush1.bf16.msra.mxu0 0
      %1309 = vmatprep.mubr.bf16.mxu0 0
      %1310 = vmatmul.mubr.bf16.gmra.mrb[0].mxu0 %v999
      %v1311 = vpop.f32.mrb[0].mxu0
      %v1312 = vadd.f32 0.0, %v1311
      %v1313 = vpop.f32.mrb[0].mxu0
      %v1314 = vpop.f32.mrb[0].mxu0
      %v1315 = vadd.f32 0.0, %v1314
      %v1316 = vpop.f32.mrb[0].mxu0
      %1317 = vdwg.mxu0
      %v1318 = vadd.f32 %v1206, %v1312
      %v1319 = vadd.f32 %v1209, %v1315
      %s1320 = scalar_lea.vmem %s4, 2
      %v1321 = vld [vmem:[%s1320] sm:$0x1]
      %v1323 = vlaneseq
      %v1324 = vshrl.u32 %v1323, 7
      %v1325 = vsub.s32 0, %v1324
      %v1326 = vrot.slane %v1321, %v1325
      %v1328 = vadd.f32 %v1318, %v1326
      %v1329 = vadd.f32 %v1319, %v1326
      %s1330 = scalar_lea.vmem %s2, 3
      %v1331 = vld [vmem:[%s1330] sm:$0x1]
      %v1333 = vlaneseq
      %v1334 = vshrl.u32 %v1333, 7
      %v1335 = vsub.s32 0, %v1334
      %v1336 = vrot.slane %v1331, %v1335
      %v1338 = vmul.f32 %v1328, %v1336
      %v1339 = vmul.f32 %v1329, %v1336
      %s1340 = scalar_lea.vmem %s3, 3
      %v1341 = vld [vmem:[%s1340] sm:$0x1]
      %v1343 = vlaneseq
      %v1344 = vshrl.u32 %v1343, 7
      %v1345 = vsub.s32 0, %v1344
      %v1346 = vrot.slane %v1341, %v1345
      %v1348 = vadd.f32 %v1338, %v1346
      %v1349 = vadd.f32 %v1339, %v1346
      %v1350 = vmax.f32 %v1348, 0.0
      %v1351 = vmax.f32 %v1349, 0.0
      %v1352 = vpack.c.bf16 %v1351, %v1350
      %v1354 = vshrl.u32 %v1352, 16
      %v1356 = vrot.slane %v1354, 7
      %v1357 = vshll.u32 %v1352, 16
      %v1359 = vor.u32 %v1356, %v1357
      %v1361 = vsel %vm259, 0, %v1359
      %v1362 = vrot.slane %v1357, 1
      %v1363 = vor.u32 %v1354, %v1362
      %v1365 = vsel %vm266, %v1363, 0
      %s1366 = scalar_lea.vmem %s1, 576
      %v1367 = vld [vmem:[%s1366] sm:$0xf]
      %v1368 = vld [vmem:[%s1366 + $0x4] sm:$0xf]
      %v1369 = vld [vmem:[%s1366 + $0x8] sm:$0xf]
      %v1370 = vld [vmem:[%s1366 + $0xc] sm:$0xf]
      %v1371 = vld [vmem:[%s1366 + $0x10] sm:$0xf]
      %v1372 = vld [vmem:[%s1366 + $0x14] sm:$0xf]
      %v1373 = vld [vmem:[%s1366 + $0x18] sm:$0xf]
      %v1374 = vld [vmem:[%s1366 + $0x1c] sm:$0xf]
      %v1375 = vld [vmem:[%s1366 + $0x20] sm:$0xf]
      %v1376 = vld [vmem:[%s1366 + $0x24] sm:$0xf]
      %v1377 = vld [vmem:[%s1366 + $0x28] sm:$0xf]
      %v1378 = vld [vmem:[%s1366 + $0x2c] sm:$0xf]
      %v1379 = vld [vmem:[%s1366 + $0x30] sm:$0xf]
      %v1380 = vld [vmem:[%s1366 + $0x34] sm:$0xf]
      %v1381 = vld [vmem:[%s1366 + $0x38] sm:$0xf]
      %v1382 = vld [vmem:[%s1366 + $0x3c] sm:$0xf]
      %s1383 = scalar_lea.vmem %s1, 640
      %v1384 = vld [vmem:[%s1383] sm:$0xf]
      %v1385 = vld [vmem:[%s1383 + $0x4] sm:$0xf]
      %v1386 = vld [vmem:[%s1383 + $0x8] sm:$0xf]
      %v1387 = vld [vmem:[%s1383 + $0xc] sm:$0xf]
      %v1388 = vld [vmem:[%s1383 + $0x10] sm:$0xf]
      %v1389 = vld [vmem:[%s1383 + $0x14] sm:$0xf]
      %v1390 = vld [vmem:[%s1383 + $0x18] sm:$0xf]
      %v1391 = vld [vmem:[%s1383 + $0x1c] sm:$0xf]
      %v1392 = vld [vmem:[%s1383 + $0x20] sm:$0xf]
      %v1393 = vld [vmem:[%s1383 + $0x24] sm:$0xf]
      %v1394 = vld [vmem:[%s1383 + $0x28] sm:$0xf]
      %v1395 = vld [vmem:[%s1383 + $0x2c] sm:$0xf]
      %v1396 = vld [vmem:[%s1383 + $0x30] sm:$0xf]
      %v1397 = vld [vmem:[%s1383 + $0x34] sm:$0xf]
      %v1398 = vld [vmem:[%s1383 + $0x38] sm:$0xf]
      %v1399 = vld [vmem:[%s1383 + $0x3c] sm:$0xf]
      %v1416 = vunpack.c.l.b16 %v1384
      %v1417 = vunpack.c.l.b16 %v1385
      %v1418 = vunpack.c.l.b16 %v1386
      %v1419 = vunpack.c.l.b16 %v1387
      %v1420 = vunpack.c.l.b16 %v1388
      %v1421 = vunpack.c.l.b16 %v1389
      %v1422 = vunpack.c.l.b16 %v1390
      %v1423 = vunpack.c.l.b16 %v1391
      %v1424 = vunpack.c.l.b16 %v1392
      %v1425 = vunpack.c.l.b16 %v1393
      %v1426 = vunpack.c.l.b16 %v1394
      %v1427 = vunpack.c.l.b16 %v1395
      %v1428 = vunpack.c.l.b16 %v1396
      %v1429 = vunpack.c.l.b16 %v1397
      %v1430 = vunpack.c.l.b16 %v1398
      %v1431 = vunpack.c.l.b16 %v1399
      %v1432 = vpack.c.b16 %v1417, %v1416
      %v1433 = vpack.c.b16 %v1419, %v1418
      %v1434 = vpack.c.b16 %v1421, %v1420
      %v1435 = vpack.c.b16 %v1423, %v1422
      %v1436 = vpack.c.b16 %v1425, %v1424
      %v1437 = vpack.c.b16 %v1427, %v1426
      %v1438 = vpack.c.b16 %v1429, %v1428
      %v1439 = vpack.c.b16 %v1431, %v1430
      %1448 = vmatprep.subr.bf16.mxu0 0
      %1449 = vmatpush1.bf16.msra.mxu0 %v1432
      %1450 = vmatprep.subr.bf16.mxu0 0
      %1451 = vmatpush1.bf16.msra.mxu0 %v1433
      %1452 = vmatprep.subr.bf16.mxu0 0
      %1453 = vmatpush1.bf16.msra.mxu0 %v1434
      %1454 = vmatprep.subr.bf16.mxu0 0
      %1455 = vmatpush1.bf16.msra.mxu0 %v1435
      %1456 = vmatprep.subr.bf16.mxu0 0
      %1457 = vmatpush1.bf16.msra.mxu0 %v1436
      %1458 = vmatprep.subr.bf16.mxu0 0
      %1459 = vmatpush1.bf16.msra.mxu0 %v1437
      %1460 = vmatprep.subr.bf16.mxu0 0
      %1461 = vmatpush1.bf16.msra.mxu0 %v1438
      %1462 = vmatprep.subr.bf16.mxu0 0
      %1463 = vmatpush1.bf16.msra.mxu0 %v1439
      %1464 = vmatprep.subr.bf16.mxu0 0
      %1465 = vmatpush1.bf16.msra.mxu0 0
      %1466 = vmatprep.subr.bf16.mxu0 0
      %1467 = vmatpush1.bf16.msra.mxu0 0
      %1468 = vmatprep.subr.bf16.mxu0 0
      %1469 = vmatpush1.bf16.msra.mxu0 0
      %1470 = vmatprep.subr.bf16.mxu0 0
      %1471 = vmatpush1.bf16.msra.mxu0 0
      %1472 = vmatprep.subr.bf16.mxu0 0
      %1473 = vmatpush1.bf16.msra.mxu0 0
      %1474 = vmatprep.subr.bf16.mxu0 0
      %1475 = vmatpush1.bf16.msra.mxu0 0
      %1476 = vmatprep.subr.bf16.mxu0 0
      %1477 = vmatpush1.bf16.msra.mxu0 0
      %1478 = vmatprep.subr.bf16.mxu0 0
      %1479 = vmatpush1.bf16.msra.mxu0 0
      %1480 = vmatprep.mubr.bf16.mxu0 0
      %1481 = vmatmul.mubr.bf16.gmra.mrb[0].mxu0 %v1352
      %v1482 = vpop.f32.mrb[0].mxu0
      %v1483 = vadd.f32 0.0, %v1482
      %v1484 = vpop.f32.mrb[0].mxu0
      %v1485 = vpop.f32.mrb[0].mxu0
      %v1486 = vadd.f32 0.0, %v1485
      %v1487 = vpop.f32.mrb[0].mxu0
      %1488 = vdwg.mxu0
      %v1505 = vunpack.c.l.b16 %v1367
      %v1506 = vunpack.c.l.b16 %v1368
      %v1507 = vunpack.c.l.b16 %v1369
      %v1508 = vunpack.c.l.b16 %v1370
      %v1509 = vunpack.c.l.b16 %v1371
      %v1510 = vunpack.c.l.b16 %v1372
      %v1511 = vunpack.c.l.b16 %v1373
      %v1512 = vunpack.c.l.b16 %v1374
      %v1513 = vunpack.c.l.b16 %v1375
      %v1514 = vunpack.c.l.b16 %v1376
      %v1515 = vunpack.c.l.b16 %v1377
      %v1516 = vunpack.c.l.b16 %v1378
      %v1517 = vunpack.c.l.b16 %v1379
      %v1518 = vunpack.c.l.b16 %v1380
      %v1519 = vunpack.c.l.b16 %v1381
      %v1520 = vunpack.c.l.b16 %v1382
      %v1521 = vpack.c.b16 %v1506, %v1505
      %v1522 = vpack.c.b16 %v1508, %v1507
      %v1523 = vpack.c.b16 %v1510, %v1509
      %v1524 = vpack.c.b16 %v1512, %v1511
      %v1525 = vpack.c.b16 %v1514, %v1513
      %v1526 = vpack.c.b16 %v1516, %v1515
      %v1527 = vpack.c.b16 %v1518, %v1517
      %v1528 = vpack.c.b16 %v1520, %v1519
      %1537 = vmatprep.subr.bf16.mxu0 0
      %1538 = vmatpush1.bf16.msra.mxu0 %v1521
      %1539 = vmatprep.subr.bf16.mxu0 0
      %1540 = vmatpush1.bf16.msra.mxu0 %v1522
      %1541 = vmatprep.subr.bf16.mxu0 0
      %1542 = vmatpush1.bf16.msra.mxu0 %v1523
      %1543 = vmatprep.subr.bf16.mxu0 0
      %1544 = vmatpush1.bf16.msra.mxu0 %v1524
      %1545 = vmatprep.subr.bf16.mxu0 0
      %1546 = vmatpush1.bf16.msra.mxu0 %v1525
      %1547 = vmatprep.subr.bf16.mxu0 0
      %1548 = vmatpush1.bf16.msra.mxu0 %v1526
      %1549 = vmatprep.subr.bf16.mxu0 0
      %1550 = vmatpush1.bf16.msra.mxu0 %v1527
      %1551 = vmatprep.subr.bf16.mxu0 0
      %1552 = vmatpush1.bf16.msra.mxu0 %v1528
      %1553 = vmatprep.subr.bf16.mxu0 0
      %1554 = vmatpush1.bf16.msra.mxu0 0
      %1555 = vmatprep.subr.bf16.mxu0 0
      %1556 = vmatpush1.bf16.msra.mxu0 0
      %1557 = vmatprep.subr.bf16.mxu0 0
      %1558 = vmatpush1.bf16.msra.mxu0 0
      %1559 = vmatprep.subr.bf16.mxu0 0
      %1560 = vmatpush1.bf16.msra.mxu0 0
      %1561 = vmatprep.subr.bf16.mxu0 0
      %1562 = vmatpush1.bf16.msra.mxu0 0
      %1563 = vmatprep.subr.bf16.mxu0 0
      %1564 = vmatpush1.bf16.msra.mxu0 0
      %1565 = vmatprep.subr.bf16.mxu0 0
      %1566 = vmatpush1.bf16.msra.mxu0 0
      %1567 = vmatprep.subr.bf16.mxu0 0
      %1568 = vmatpush1.bf16.msra.mxu0 0
      %1569 = vmatprep.mubr.bf16.mxu0 0
      %1570 = vmatmul.mubr.bf16.gmra.mrb[0].mxu0 %v1361
      %v1571 = vpop.f32.mrb[0].mxu0
      %v1572 = vadd.f32 %v1483, %v1571
      %v1573 = vpop.f32.mrb[0].mxu0
      %v1574 = vpop.f32.mrb[0].mxu0
      %v1575 = vadd.f32 %v1486, %v1574
      %v1576 = vpop.f32.mrb[0].mxu0
      %1577 = vdwg.mxu0
      %s1578 = scalar_lea.vmem %s1, 704
      %v1579 = vld [vmem:[%s1578] sm:$0xf]
      %v1580 = vld [vmem:[%s1578 + $0x4] sm:$0xf]
      %v1581 = vld [vmem:[%s1578 + $0x8] sm:$0xf]
      %v1582 = vld [vmem:[%s1578 + $0xc] sm:$0xf]
      %v1583 = vld [vmem:[%s1578 + $0x10] sm:$0xf]
      %v1584 = vld [vmem:[%s1578 + $0x14] sm:$0xf]
      %v1585 = vld [vmem:[%s1578 + $0x18] sm:$0xf]
      %v1586 = vld [vmem:[%s1578 + $0x1c] sm:$0xf]
      %v1587 = vld [vmem:[%s1578 + $0x20] sm:$0xf]
      %v1588 = vld [vmem:[%s1578 + $0x24] sm:$0xf]
      %v1589 = vld [vmem:[%s1578 + $0x28] sm:$0xf]
      %v1590 = vld [vmem:[%s1578 + $0x2c] sm:$0xf]
      %v1591 = vld [vmem:[%s1578 + $0x30] sm:$0xf]
      %v1592 = vld [vmem:[%s1578 + $0x34] sm:$0xf]
      %v1593 = vld [vmem:[%s1578 + $0x38] sm:$0xf]
      %v1594 = vld [vmem:[%s1578 + $0x3c] sm:$0xf]
      %v1611 = vunpack.c.l.b16 %v1579
      %v1612 = vunpack.c.l.b16 %v1580
      %v1613 = vunpack.c.l.b16 %v1581
      %v1614 = vunpack.c.l.b16 %v1582
      %v1615 = vunpack.c.l.b16 %v1583
      %v1616 = vunpack.c.l.b16 %v1584
      %v1617 = vunpack.c.l.b16 %v1585
      %v1618 = vunpack.c.l.b16 %v1586
      %v1619 = vunpack.c.l.b16 %v1587
      %v1620 = vunpack.c.l.b16 %v1588
      %v1621 = vunpack.c.l.b16 %v1589
      %v1622 = vunpack.c.l.b16 %v1590
      %v1623 = vunpack.c.l.b16 %v1591
      %v1624 = vunpack.c.l.b16 %v1592
      %v1625 = vunpack.c.l.b16 %v1593
      %v1626 = vunpack.c.l.b16 %v1594
      %v1627 = vpack.c.b16 %v1612, %v1611
      %v1628 = vpack.c.b16 %v1614, %v1613
      %v1629 = vpack.c.b16 %v1616, %v1615
      %v1630 = vpack.c.b16 %v1618, %v1617
      %v1631 = vpack.c.b16 %v1620, %v1619
      %v1632 = vpack.c.b16 %v1622, %v1621
      %v1633 = vpack.c.b16 %v1624, %v1623
      %v1634 = vpack.c.b16 %v1626, %v1625
      %1643 = vmatprep.subr.bf16.mxu0 0
      %1644 = vmatpush1.bf16.msra.mxu0 %v1627
      %1645 = vmatprep.subr.bf16.mxu0 0
      %1646 = vmatpush1.bf16.msra.mxu0 %v1628
      %1647 = vmatprep.subr.bf16.mxu0 0
      %1648 = vmatpush1.bf16.msra.mxu0 %v1629
      %1649 = vmatprep.subr.bf16.mxu0 0
      %1650 = vmatpush1.bf16.msra.mxu0 %v1630
      %1651 = vmatprep.subr.bf16.mxu0 0
      %1652 = vmatpush1.bf16.msra.mxu0 %v1631
      %1653 = vmatprep.subr.bf16.mxu0 0
      %1654 = vmatpush1.bf16.msra.mxu0 %v1632
      %1655 = vmatprep.subr.bf16.mxu0 0
      %1656 = vmatpush1.bf16.msra.mxu0 %v1633
      %1657 = vmatprep.subr.bf16.mxu0 0
      %1658 = vmatpush1.bf16.msra.mxu0 %v1634
      %1659 = vmatprep.subr.bf16.mxu0 0
      %1660 = vmatpush1.bf16.msra.mxu0 0
      %1661 = vmatprep.subr.bf16.mxu0 0
      %1662 = vmatpush1.bf16.msra.mxu0 0
      %1663 = vmatprep.subr.bf16.mxu0 0
      %1664 = vmatpush1.bf16.msra.mxu0 0
      %1665 = vmatprep.subr.bf16.mxu0 0
      %1666 = vmatpush1.bf16.msra.mxu0 0
      %1667 = vmatprep.subr.bf16.mxu0 0
      %1668 = vmatpush1.bf16.msra.mxu0 0
      %1669 = vmatprep.subr.bf16.mxu0 0
      %1670 = vmatpush1.bf16.msra.mxu0 0
      %1671 = vmatprep.subr.bf16.mxu0 0
      %1672 = vmatpush1.bf16.msra.mxu0 0
      %1673 = vmatprep.subr.bf16.mxu0 0
      %1674 = vmatpush1.bf16.msra.mxu0 0
      %1675 = vmatprep.mubr.bf16.mxu0 0
      %1676 = vmatmul.mubr.bf16.gmra.mrb[0].mxu0 %v1365
      %v1677 = vpop.f32.mrb[0].mxu0
      %v1678 = vadd.f32 0.0, %v1677
      %v1679 = vpop.f32.mrb[0].mxu0
      %v1680 = vpop.f32.mrb[0].mxu0
      %v1681 = vadd.f32 0.0, %v1680
      %v1682 = vpop.f32.mrb[0].mxu0
      %1683 = vdwg.mxu0
      %v1684 = vadd.f32 %v1572, %v1678
      %v1685 = vadd.f32 %v1575, %v1681
      %s1686 = scalar_lea.vmem %s4, 3
      %v1687 = vld [vmem:[%s1686] sm:$0x1]
      %v1689 = vlaneseq
      %v1690 = vshrl.u32 %v1689, 7
      %v1691 = vsub.s32 0, %v1690
      %v1692 = vrot.slane %v1687, %v1691
      %v1694 = vadd.f32 %v1684, %v1692
      %v1695 = vadd.f32 %v1685, %v1692
      %v1696 = vadd.f32 %v1694, %v962
      %v1697 = vadd.f32 %v1695, %v963
      %1698 = vst [vmem:[%s224] sm:$0xff] %v1696
      %1699 = vst [vmem:[%s224 + $0x8] sm:$0xff] %v1697
      %p1700 = scmp.lt.s32.totalorder %s16, 1
      %s1701 = scalar_select %p1700, %s16, 1
      %s1702 = smul.addr %s1701, 2
      %s1703 = smul.addr %s1702, 8
      %s1704 = scalar_lea.vmem %s5, %s1703
      // Predicated region
      $region41: #{resbottleneck_forward.1} parent=39 // pred_check
        %p1705 = pneg %p144
      $region42: #{resbottleneck_forward.1} parent=39 // pred_check_branch
        %1707 = sbr.rel (%p1705) target = $region44
      $region43: #{resbottleneck_forward.1} parent=39 // pred_region
        _
      $region44: #{resbottleneck_forward.1} parent=39 // pred_fallthru
        _
    $region40: #{resbottleneck_forward.1} parent=5 // pred_fallthru
      _
    %p1708 = scmp.le.s32.totalorder 2, %s11
    // Predicated region
    $region45: #{resbottleneck_forward.1} parent=5 // pred_check
      %p1709 = pneg %p1708
    $region46: #{resbottleneck_forward.1} parent=5 // pred_check_branch
      %1711 = sbr.rel (%p1709) target = $region48
    $region47: #{resbottleneck_forward.1} parent=5 // pred_region
      %s1712 = ssub.s32 %s11, 2
      // Predicated region
      $region49: #{resbottleneck_forward.1} parent=47 // pred_check
        %p1713 = pneg %p150
      $region50: #{resbottleneck_forward.1} parent=47 // pred_check_branch
        %1715 = sbr.rel (%p1713) target = $region52
      $region51: #{resbottleneck_forward.1} parent=47 // pred_region
        %p1716 = scmp.lt.s32.totalorder %s17, 1
        %s1717 = scalar_select %p1716, %s17, 1
        %s1718 = smul.addr %s1717, 2
        %s1719 = smul.addr %s1718, 8
        %s1720 = scalar_lea.vmem %s5, %s1719
      $region52: #{resbottleneck_forward.1} parent=47 // pred_fallthru
        _
    $region48: #{resbottleneck_forward.1} parent=5 // pred_fallthru
      _
  $region6: #{resbottleneck_forward.1} parent=0 // loop_footer
    %s15 = sadd.s32 1, %s11
  $region7: #{resbottleneck_forward.1} parent=0 // loop_footer_branch
    %10 = sbr.rel target = $region3
  $region8: #{resbottleneck_forward.1} parent=0 // loop_exit
    _

</llo_original>
